<compile_context>
chip_gen: v6e
topology: v6e:2x2x1
jax: 0.10.0
libtpu: 0.0.40
codegen_flags: <defaults>
</compile_context>

<pallas_src>
import jax
import jax.numpy as jnp
from jax import lax
from jax.experimental import pallas as pl
from jax.experimental.pallas import tpu as pltpu  # noqa: F401

HIDDEN = 32
HEADS = 4
HEAD_DIM = HIDDEN // HEADS
INTER = 64
SEQ = 8
BATCH = 2
EPS = 1e-5  # PyTorch LayerNorm default eps

LANES = 128  # lane-dense slab width

# Row layout of the packed parameter slab (168 rows x 128 lanes, f32):
_R_WQKV = 0                    # rows [  0,  32): wqkv_t  (32, 96)
_R_WO = _R_WQKV + HIDDEN       # rows [ 32,  64): wo_t    (32, 32)
_R_WI = _R_WO + HIDDEN         # rows [ 64,  96): wi_t    (32, 64)
_R_WOUT = _R_WI + HIDDEN       # rows [ 96, 160): wout_t  (64, 32)
_R_VEC = _R_WOUT + INTER       # rows [160, 168): 8 packed vectors (8, 96)
_SLAB_ROWS = _R_VEC + 8        # 168 (multiple of 8 sublanes)

# Indices of the packed small vectors within the vec block.
_BQKV, _BO, _BI, _BOUT, _G1, _B1, _G2, _B2 = range(8)
_VEC_W = 3 * HIDDEN  # 96


def _layernorm(x, gamma, beta):
    # PyTorch LayerNorm: biased variance over last dim.
    mean = jnp.mean(x, axis=-1, keepdims=True)
    var = jnp.mean(jnp.square(x - mean), axis=-1, keepdims=True)
    return (x - mean) * lax.rsqrt(var + EPS) * gamma + beta


def ekd_layer_kernel(x_ref, params_ref, o_ref):
    x = x_ref[...]  # (S*B, H) f32, seq-major rows

    # Static slices of the single parameter slab (loads from VMEM, no DMA).
    wqkv = params_ref[_R_WQKV:_R_WQKV + HIDDEN, 0:3 * HIDDEN]   # (32, 96), Q cols pre-scaled
    wo = params_ref[_R_WO:_R_WO + HIDDEN, 0:HIDDEN]             # (32, 32) pre-transposed
    wi = params_ref[_R_WI:_R_WI + HIDDEN, 0:INTER]              # (32, 64) pre-transposed
    wout = params_ref[_R_WOUT:_R_WOUT + INTER, 0:HIDDEN]        # (64, 32) pre-transposed
    vecs = params_ref[_R_VEC:_R_VEC + 8, 0:_VEC_W]              # (8, 96) packed vectors

    bqkv = vecs[_BQKV:_BQKV + 1, :]                 # (1, 3H), Q part pre-scaled
    bo = vecs[_BO:_BO + 1, :HIDDEN]
    bi = vecs[_BI:_BI + 1, :INTER]
    bout = vecs[_BOUT:_BOUT + 1, :HIDDEN]
    g1 = vecs[_G1:_G1 + 1, :HIDDEN]
    b1 = vecs[_B1:_B1 + 1, :HIDDEN]
    g2 = vecs[_G2:_G2 + 1, :HIDDEN]
    b2 = vecs[_B2:_B2 + 1, :HIDDEN]

    n = x.shape[0]  # S*B

    # --- fused QKV projection for all positions/batches at once ---
    qkv = jnp.dot(x, wqkv, preferred_element_type=jnp.float32) + bqkv   # (n, 3H)

    q = qkv[:, 0:HIDDEN]                           # (n, H), already * 1/sqrt(hd)
    kT = qkv[:, HIDDEN:2 * HIDDEN].T               # (H, n) — single hoisted transpose
    v = qkv[:, 2 * HIDDEN:3 * HIDDEN]              # (n, H)

    # Rows are seq-major (row = s*B + b): same batch iff row % B == col % B.
    # Additive mask computed ONCE and reused by every unrolled head.
    rows = lax.broadcasted_iota(jnp.int32, (n, n), 0) % BATCH
    cols = lax.broadcasted_iota(jnp.int32, (n, n), 1) % BATCH
    neg = jnp.where(rows == cols, 0.0, -1e30)      # (n, n)

    # --- multi-head self-attention (4 heads, static unroll) ---
    ctx_heads = []
    for h in range(HEADS):
        lo, hi = h * HEAD_DIM, (h + 1) * HEAD_DIM
        scores = jnp.dot(q[:, lo:hi], kT[lo:hi, :],
                         preferred_element_type=jnp.float32) + neg       # (n, n)
        m = jnp.max(scores, axis=-1, keepdims=True)
        e = jnp.exp(scores - m)
        p = e * pl.reciprocal(jnp.sum(e, axis=-1, keepdims=True), approx=False)
        ctx_heads.append(jnp.dot(p, v[:, lo:hi],
                                 preferred_element_type=jnp.float32))    # (n, hd)

    # Fused output projection: one (n,H)@(H,H) matmul instead of 4 accumulating ones.
    ctx = jnp.concatenate(ctx_heads, axis=-1)                            # (n, H)
    attn = jnp.dot(ctx, wo, preferred_element_type=jnp.float32) + bo     # (n, H)

    # --- residual + LayerNorm 1 ---
    out1 = _layernorm(x + attn, g1, b1)

    # --- feed-forward (two Linears, no activation in the reference module) ---
    inter = jnp.dot(out1, wi, preferred_element_type=jnp.float32) + bi
    layer_out = jnp.dot(inter, wout, preferred_element_type=jnp.float32) + bout

    # --- residual + LayerNorm 2 ---
    out2 = _layernorm(out1 + layer_out, g2, b2)

    o_ref[...] = out2.astype(o_ref.dtype)


def make_params(key):
    """Parameters in PyTorch layout (as nn.MultiheadAttention / nn.Linear store them)."""
    ks = jax.random.split(key, 6)
    init = lambda k, shape: (0.02 * jax.random.normal(k, shape)).astype(jnp.float32)
    return {
        "in_proj_weight": init(ks[0], (3 * HIDDEN, HIDDEN)),
        "in_proj_bias": init(ks[1], (3 * HIDDEN,)),
        "out_proj_weight": init(ks[2], (HIDDEN, HIDDEN)),
        "out_proj_bias": init(ks[3], (HIDDEN,)),
        "intermediate_weight": init(ks[4], (INTER, HIDDEN)),
        "intermediate_bias": jnp.zeros((INTER,), jnp.float32),
        "output_weight": init(ks[5], (HIDDEN, INTER)),
        "output_bias": jnp.zeros((HIDDEN,), jnp.float32),
        "norm1_weight": jnp.ones((HIDDEN,), jnp.float32),
        "norm1_bias": jnp.zeros((HIDDEN,), jnp.float32),
        "norm2_weight": jnp.ones((HIDDEN,), jnp.float32),
        "norm2_bias": jnp.zeros((HIDDEN,), jnp.float32),
    }


def pack_params(p):
    """One-time host-side repack into a single lane-dense (168, 128) f32 slab:
    transpose weights, fold 1/sqrt(head_dim) into the Q projection, pack the
    8 small vectors, pad everything to 128 lanes."""
    scale = 1.0 / (HEAD_DIM ** 0.5)
    qkv_scale = jnp.concatenate(
        [jnp.full((HIDDEN,), scale, jnp.float32),
         jnp.ones((2 * HIDDEN,), jnp.float32)])
    wqkv_t = (p["in_proj_weight"] * qkv_scale[:, None]).T      # (32, 96)
    bqkv = p["in_proj_bias"] * qkv_scale                       # (96,)

    def vec_row(v):
        return jnp.pad(v, (0, _VEC_W - v.shape[0]))[None, :]

    vecs = jnp.concatenate(
        [vec_row(bqkv), vec_row(p["out_proj_bias"]), vec_row(p["intermediate_bias"]),
         vec_row(p["output_bias"]), vec_row(p["norm1_weight"]), vec_row(p["norm1_bias"]),
         vec_row(p["norm2_weight"]), vec_row(p["norm2_bias"])], axis=0)  # (8, 96)

    def pad_lanes(a):
        return jnp.pad(a, ((0, 0), (0, LANES - a.shape[1])))

    slab = jnp.concatenate(
        [pad_lanes(wqkv_t),                          # rows [  0,  32)
         pad_lanes(p["out_proj_weight"].T),          # rows [ 32,  64)
         pad_lanes(p["intermediate_weight"].T),      # rows [ 64,  96)
         pad_lanes(p["output_weight"].T),            # rows [ 96, 160)
         pad_lanes(vecs)],                           # rows [160, 168)
        axis=0).astype(jnp.float32)
    assert slab.shape == (_SLAB_ROWS, LANES)
    return slab


def ekd_transformer_layer(hidden_states, params_slab):
    """hidden_states: (S, B, H) — PyTorch MultiheadAttention default layout.
    Row-major reshape to (S*B, H) is a free view; no transposes anywhere."""
    S, B, H = hidden_states.shape
    x = hidden_states.reshape(S * B, H)  # seq-major rows (row = s*B + b)
    out = pl.pallas_call(
        ekd_layer_kernel,
        out_shape=jax.ShapeDtypeStruct((S * B, H), hidden_states.dtype),
    )(x, params_slab)
    return out.reshape(S, B, H)


if __name__ == "__main__":
    key = jax.random.PRNGKey(0)
    k_x, k_p = jax.random.split(key)
    params_slab = pack_params(make_params(k_p))
    hidden_states = jax.random.normal(k_x, (SEQ, BATCH, HIDDEN), jnp.float32)

    out = jax.jit(ekd_transformer_layer)(hidden_states, params_slab)
    out = jax.block_until_ready(out)

    assert out.shape == (SEQ, BATCH, HIDDEN)
    assert bool(jnp.all(jnp.isfinite(out)))
    print("KERNEL_OK")
</pallas_src>

<mosaic_0001>
module attributes {stable_mosaic.version = 11 : i64} {
  func.func @ekd_layer_kernel(%arg0: memref<16x32xf32, #tpu.memory_space<vmem>>, %arg1: memref<168x128xf32, #tpu.memory_space<vmem>>, %arg2: memref<16x32xf32, #tpu.memory_space<vmem>>) attributes {dimension_semantics = [], scalar_prefetch = 0 : i64, scratch_operands = 0 : i64, tpu.core_type = #tpu.core_type<tc>} {
    %c0 = arith.constant 0 : index
    %c0_0 = arith.constant 0 : index
    %0 = vector.load %arg0[%c0, %c0_0] : memref<16x32xf32, #tpu.memory_space<vmem>>, vector<16x32xf32>
    %c0_1 = arith.constant 0 : index
    %c0_2 = arith.constant 0 : index
    %1 = vector.load %arg1[%c0_1, %c0_2] : memref<168x128xf32, #tpu.memory_space<vmem>>, vector<32x96xf32>
    %c32 = arith.constant 32 : index
    %c0_3 = arith.constant 0 : index
    %2 = vector.load %arg1[%c32, %c0_3] : memref<168x128xf32, #tpu.memory_space<vmem>>, vector<32x32xf32>
    %c64 = arith.constant 64 : index
    %c0_4 = arith.constant 0 : index
    %3 = vector.load %arg1[%c64, %c0_4] : memref<168x128xf32, #tpu.memory_space<vmem>>, vector<32x64xf32>
    %c96 = arith.constant 96 : index
    %c0_5 = arith.constant 0 : index
    %4 = vector.load %arg1[%c96, %c0_5] : memref<168x128xf32, #tpu.memory_space<vmem>>, vector<64x32xf32>
    %c160 = arith.constant 160 : index
    %c0_6 = arith.constant 0 : index
    %5 = vector.load %arg1[%c160, %c0_6] : memref<168x128xf32, #tpu.memory_space<vmem>>, vector<8x96xf32>
    %6 = vector.extract_strided_slice %5 {offsets = [0, 0], sizes = [1, 96], strides = [1, 1]} : vector<8x96xf32> to vector<1x96xf32>
    %7 = vector.extract_strided_slice %5 {offsets = [1, 0], sizes = [1, 32], strides = [1, 1]} : vector<8x96xf32> to vector<1x32xf32>
    %8 = vector.extract_strided_slice %5 {offsets = [2, 0], sizes = [1, 64], strides = [1, 1]} : vector<8x96xf32> to vector<1x64xf32>
    %9 = vector.extract_strided_slice %5 {offsets = [3, 0], sizes = [1, 32], strides = [1, 1]} : vector<8x96xf32> to vector<1x32xf32>
    %10 = vector.extract_strided_slice %5 {offsets = [4, 0], sizes = [1, 32], strides = [1, 1]} : vector<8x96xf32> to vector<1x32xf32>
    %11 = vector.extract_strided_slice %5 {offsets = [5, 0], sizes = [1, 32], strides = [1, 1]} : vector<8x96xf32> to vector<1x32xf32>
    %12 = vector.extract_strided_slice %5 {offsets = [6, 0], sizes = [1, 32], strides = [1, 1]} : vector<8x96xf32> to vector<1x32xf32>
    %13 = vector.extract_strided_slice %5 {offsets = [7, 0], sizes = [1, 32], strides = [1, 1]} : vector<8x96xf32> to vector<1x32xf32>
    %cst = arith.constant dense<0.000000e+00> : vector<16x96xf32>
    %14 = tpu.matmul %0, %1, %cst {dimension_numbers = #tpu.dot_dimension_numbers<[1], [0], [0], [1], [0, 0, 1, 1], [], []>} : vector<16x32xf32>, vector<32x96xf32>, vector<16x96xf32> -> vector<16x96xf32>
    %15 = vector.broadcast %6 : vector<1x96xf32> to vector<16x96xf32>
    %16 = arith.addf %14, %15 : vector<16x96xf32>
    %17 = vector.extract_strided_slice %16 {offsets = [0, 0], sizes = [16, 32], strides = [1, 1]} : vector<16x96xf32> to vector<16x32xf32>
    %18 = vector.extract_strided_slice %16 {offsets = [0, 32], sizes = [16, 32], strides = [1, 1]} : vector<16x96xf32> to vector<16x32xf32>
    %19 = tpu.transpose %18, [1, 0] : vector<16x32xf32> -> vector<32x16xf32>
    %20 = vector.extract_strided_slice %16 {offsets = [0, 64], sizes = [16, 32], strides = [1, 1]} : vector<16x96xf32> to vector<16x32xf32>
    %21 = tpu.iota {dimensions = array<i32: 0>} : vector<16x16xi32>
    %c2_i32 = arith.constant 2 : i32
    %c0_i32 = arith.constant 0 : i32
    %22 = arith.cmpi eq, %c2_i32, %c0_i32 : i32
    %c1_i32 = arith.constant 1 : i32
    %23 = arith.select %22, %c1_i32, %c2_i32 : i32
    %24 = vector.broadcast %23 : i32 to vector<16x16xi32>
    %25 = arith.remsi %21, %24 : vector<16x16xi32>
    %c0_i32_7 = arith.constant 0 : i32
    %26 = vector.broadcast %c0_i32_7 : i32 to vector<16x16xi32>
    %27 = arith.cmpi ne, %25, %26 : vector<16x16xi32>
    %c0_i32_8 = arith.constant 0 : i32
    %28 = vector.broadcast %c0_i32_8 : i32 to vector<16x16xi32>
    %29 = arith.cmpi slt, %25, %28 : vector<16x16xi32>
    %c0_i32_9 = arith.constant 0 : i32
    %30 = arith.cmpi slt, %23, %c0_i32_9 : i32
    %31 = vector.broadcast %30 : i1 to vector<16x16xi1>
    %32 = vector.broadcast %31 : vector<16x16xi1> to vector<16x16xi1>
    %33 = arith.xori %29, %32 : vector<16x16xi1>
    %34 = arith.andi %33, %27 : vector<16x16xi1>
    %35 = vector.broadcast %23 : i32 to vector<16x16xi32>
    %36 = arith.addi %25, %35 : vector<16x16xi32>
    %37 = arith.select %34, %36, %25 : vector<16x16xi1>, vector<16x16xi32>
    %38 = tpu.iota {dimensions = array<i32: 1>} : vector<16x16xi32>
    %c2_i32_10 = arith.constant 2 : i32
    %c0_i32_11 = arith.constant 0 : i32
    %39 = arith.cmpi eq, %c2_i32_10, %c0_i32_11 : i32
    %c1_i32_12 = arith.constant 1 : i32
    %40 = arith.select %39, %c1_i32_12, %c2_i32_10 : i32
    %41 = vector.broadcast %40 : i32 to vector<16x16xi32>
    %42 = arith.remsi %38, %41 : vector<16x16xi32>
    %c0_i32_13 = arith.constant 0 : i32
    %43 = vector.broadcast %c0_i32_13 : i32 to vector<16x16xi32>
    %44 = arith.cmpi ne, %42, %43 : vector<16x16xi32>
    %c0_i32_14 = arith.constant 0 : i32
    %45 = vector.broadcast %c0_i32_14 : i32 to vector<16x16xi32>
    %46 = arith.cmpi slt, %42, %45 : vector<16x16xi32>
    %c0_i32_15 = arith.constant 0 : i32
    %47 = arith.cmpi slt, %40, %c0_i32_15 : i32
    %48 = vector.broadcast %47 : i1 to vector<16x16xi1>
    %49 = vector.broadcast %48 : vector<16x16xi1> to vector<16x16xi1>
    %50 = arith.xori %46, %49 : vector<16x16xi1>
    %51 = arith.andi %50, %44 : vector<16x16xi1>
    %52 = vector.broadcast %40 : i32 to vector<16x16xi32>
    %53 = arith.addi %42, %52 : vector<16x16xi32>
    %54 = arith.select %51, %53, %42 : vector<16x16xi1>, vector<16x16xi32>
    %55 = arith.cmpi eq, %37, %54 : vector<16x16xi32>
    %cst_16 = arith.constant 0.000000e+00 : f32
    %cst_17 = arith.constant -1.000000e+30 : f32
    %56 = vector.broadcast %cst_16 : f32 to vector<16x16xf32>
    %57 = vector.broadcast %cst_17 : f32 to vector<16x16xf32>
    %58 = arith.select %55, %56, %57 : vector<16x16xi1>, vector<16x16xf32>
    %59 = vector.extract_strided_slice %17 {offsets = [0, 0], sizes = [16, 8], strides = [1, 1]} : vector<16x32xf32> to vector<16x8xf32>
    %60 = vector.extract_strided_slice %19 {offsets = [0, 0], sizes = [8, 16], strides = [1, 1]} : vector<32x16xf32> to vector<8x16xf32>
    %cst_18 = arith.constant dense<0.000000e+00> : vector<16x16xf32>
    %61 = tpu.matmul %59, %60, %cst_18 {dimension_numbers = #tpu.dot_dimension_numbers<[1], [0], [0], [1], [0, 0, 1, 1], [], []>} : vector<16x8xf32>, vector<8x16xf32>, vector<16x16xf32> -> vector<16x16xf32>
    %62 = arith.addf %61, %58 : vector<16x16xf32>
    %cst_19 = arith.constant dense<0xFF800000> : vector<16xf32>
    %63 = vector.multi_reduction <maximumf>, %62, %cst_19 [1] : vector<16x16xf32> to vector<16xf32>
    %64 = vector.shape_cast %63 : vector<16xf32> to vector<16x1xf32>
    %65 = vector.broadcast %64 : vector<16x1xf32> to vector<16x16xf32>
    %66 = arith.subf %62, %65 : vector<16x16xf32>
    %67 = math.exp %66 : vector<16x16xf32>
    %cst_20 = arith.constant dense<0.000000e+00> : vector<16xf32>
    %68 = vector.multi_reduction <add>, %67, %cst_20 [1] : vector<16x16xf32> to vector<16xf32>
    %69 = vector.shape_cast %68 : vector<16xf32> to vector<16x1xf32>
    %70 = tpu.reciprocal %69 : vector<16x1xf32> -> vector<16x1xf32>
    %71 = vector.broadcast %70 : vector<16x1xf32> to vector<16x16xf32>
    %72 = arith.mulf %67, %71 : vector<16x16xf32>
    %73 = vector.extract_strided_slice %20 {offsets = [0, 0], sizes = [16, 8], strides = [1, 1]} : vector<16x32xf32> to vector<16x8xf32>
    %cst_21 = arith.constant dense<0.000000e+00> : vector<16x8xf32>
    %74 = tpu.matmul %72, %73, %cst_21 {dimension_numbers = #tpu.dot_dimension_numbers<[1], [0], [0], [1], [0, 0, 1, 1], [], []>} : vector<16x16xf32>, vector<16x8xf32>, vector<16x8xf32> -> vector<16x8xf32>
    %75 = vector.extract_strided_slice %17 {offsets = [0, 8], sizes = [16, 8], strides = [1, 1]} : vector<16x32xf32> to vector<16x8xf32>
    %76 = vector.extract_strided_slice %19 {offsets = [8, 0], sizes = [8, 16], strides = [1, 1]} : vector<32x16xf32> to vector<8x16xf32>
    %cst_22 = arith.constant dense<0.000000e+00> : vector<16x16xf32>
    %77 = tpu.matmul %75, %76, %cst_22 {dimension_numbers = #tpu.dot_dimension_numbers<[1], [0], [0], [1], [0, 0, 1, 1], [], []>} : vector<16x8xf32>, vector<8x16xf32>, vector<16x16xf32> -> vector<16x16xf32>
    %78 = arith.addf %77, %58 : vector<16x16xf32>
    %cst_23 = arith.constant dense<0xFF800000> : vector<16xf32>
    %79 = vector.multi_reduction <maximumf>, %78, %cst_23 [1] : vector<16x16xf32> to vector<16xf32>
    %80 = vector.shape_cast %79 : vector<16xf32> to vector<16x1xf32>
    %81 = vector.broadcast %80 : vector<16x1xf32> to vector<16x16xf32>
    %82 = arith.subf %78, %81 : vector<16x16xf32>
    %83 = math.exp %82 : vector<16x16xf32>
    %cst_24 = arith.constant dense<0.000000e+00> : vector<16xf32>
    %84 = vector.multi_reduction <add>, %83, %cst_24 [1] : vector<16x16xf32> to vector<16xf32>
    %85 = vector.shape_cast %84 : vector<16xf32> to vector<16x1xf32>
    %86 = tpu.reciprocal %85 : vector<16x1xf32> -> vector<16x1xf32>
    %87 = vector.broadcast %86 : vector<16x1xf32> to vector<16x16xf32>
    %88 = arith.mulf %83, %87 : vector<16x16xf32>
    %89 = vector.extract_strided_slice %20 {offsets = [0, 8], sizes = [16, 8], strides = [1, 1]} : vector<16x32xf32> to vector<16x8xf32>
    %cst_25 = arith.constant dense<0.000000e+00> : vector<16x8xf32>
    %90 = tpu.matmul %88, %89, %cst_25 {dimension_numbers = #tpu.dot_dimension_numbers<[1], [0], [0], [1], [0, 0, 1, 1], [], []>} : vector<16x16xf32>, vector<16x8xf32>, vector<16x8xf32> -> vector<16x8xf32>
    %91 = vector.extract_strided_slice %17 {offsets = [0, 16], sizes = [16, 8], strides = [1, 1]} : vector<16x32xf32> to vector<16x8xf32>
    %92 = vector.extract_strided_slice %19 {offsets = [16, 0], sizes = [8, 16], strides = [1, 1]} : vector<32x16xf32> to vector<8x16xf32>
    %cst_26 = arith.constant dense<0.000000e+00> : vector<16x16xf32>
    %93 = tpu.matmul %91, %92, %cst_26 {dimension_numbers = #tpu.dot_dimension_numbers<[1], [0], [0], [1], [0, 0, 1, 1], [], []>} : vector<16x8xf32>, vector<8x16xf32>, vector<16x16xf32> -> vector<16x16xf32>
    %94 = arith.addf %93, %58 : vector<16x16xf32>
    %cst_27 = arith.constant dense<0xFF800000> : vector<16xf32>
    %95 = vector.multi_reduction <maximumf>, %94, %cst_27 [1] : vector<16x16xf32> to vector<16xf32>
    %96 = vector.shape_cast %95 : vector<16xf32> to vector<16x1xf32>
    %97 = vector.broadcast %96 : vector<16x1xf32> to vector<16x16xf32>
    %98 = arith.subf %94, %97 : vector<16x16xf32>
    %99 = math.exp %98 : vector<16x16xf32>
    %cst_28 = arith.constant dense<0.000000e+00> : vector<16xf32>
    %100 = vector.multi_reduction <add>, %99, %cst_28 [1] : vector<16x16xf32> to vector<16xf32>
    %101 = vector.shape_cast %100 : vector<16xf32> to vector<16x1xf32>
    %102 = tpu.reciprocal %101 : vector<16x1xf32> -> vector<16x1xf32>
    %103 = vector.broadcast %102 : vector<16x1xf32> to vector<16x16xf32>
    %104 = arith.mulf %99, %103 : vector<16x16xf32>
    %105 = vector.extract_strided_slice %20 {offsets = [0, 16], sizes = [16, 8], strides = [1, 1]} : vector<16x32xf32> to vector<16x8xf32>
    %cst_29 = arith.constant dense<0.000000e+00> : vector<16x8xf32>
    %106 = tpu.matmul %104, %105, %cst_29 {dimension_numbers = #tpu.dot_dimension_numbers<[1], [0], [0], [1], [0, 0, 1, 1], [], []>} : vector<16x16xf32>, vector<16x8xf32>, vector<16x8xf32> -> vector<16x8xf32>
    %107 = vector.extract_strided_slice %17 {offsets = [0, 24], sizes = [16, 8], strides = [1, 1]} : vector<16x32xf32> to vector<16x8xf32>
    %108 = vector.extract_strided_slice %19 {offsets = [24, 0], sizes = [8, 16], strides = [1, 1]} : vector<32x16xf32> to vector<8x16xf32>
    %cst_30 = arith.constant dense<0.000000e+00> : vector<16x16xf32>
    %109 = tpu.matmul %107, %108, %cst_30 {dimension_numbers = #tpu.dot_dimension_numbers<[1], [0], [0], [1], [0, 0, 1, 1], [], []>} : vector<16x8xf32>, vector<8x16xf32>, vector<16x16xf32> -> vector<16x16xf32>
    %110 = arith.addf %109, %58 : vector<16x16xf32>
    %cst_31 = arith.constant dense<0xFF800000> : vector<16xf32>
    %111 = vector.multi_reduction <maximumf>, %110, %cst_31 [1] : vector<16x16xf32> to vector<16xf32>
    %112 = vector.shape_cast %111 : vector<16xf32> to vector<16x1xf32>
    %113 = vector.broadcast %112 : vector<16x1xf32> to vector<16x16xf32>
    %114 = arith.subf %110, %113 : vector<16x16xf32>
    %115 = math.exp %114 : vector<16x16xf32>
    %cst_32 = arith.constant dense<0.000000e+00> : vector<16xf32>
    %116 = vector.multi_reduction <add>, %115, %cst_32 [1] : vector<16x16xf32> to vector<16xf32>
    %117 = vector.shape_cast %116 : vector<16xf32> to vector<16x1xf32>
    %118 = tpu.reciprocal %117 : vector<16x1xf32> -> vector<16x1xf32>
    %119 = vector.broadcast %118 : vector<16x1xf32> to vector<16x16xf32>
    %120 = arith.mulf %115, %119 : vector<16x16xf32>
    %121 = vector.extract_strided_slice %20 {offsets = [0, 24], sizes = [16, 8], strides = [1, 1]} : vector<16x32xf32> to vector<16x8xf32>
    %cst_33 = arith.constant dense<0.000000e+00> : vector<16x8xf32>
    %122 = tpu.matmul %120, %121, %cst_33 {dimension_numbers = #tpu.dot_dimension_numbers<[1], [0], [0], [1], [0, 0, 1, 1], [], []>} : vector<16x16xf32>, vector<16x8xf32>, vector<16x8xf32> -> vector<16x8xf32>
    %123 = tpu.concatenate %74, %90, %106, %122 in 1 : vector<16x8xf32>, vector<16x8xf32>, vector<16x8xf32>, vector<16x8xf32> -> vector<16x32xf32>
    %cst_34 = arith.constant dense<0.000000e+00> : vector<16x32xf32>
    %124 = tpu.matmul %123, %2, %cst_34 {dimension_numbers = #tpu.dot_dimension_numbers<[1], [0], [0], [1], [0, 0, 1, 1], [], []>} : vector<16x32xf32>, vector<32x32xf32>, vector<16x32xf32> -> vector<16x32xf32>
    %125 = vector.broadcast %7 : vector<1x32xf32> to vector<16x32xf32>
    %126 = arith.addf %124, %125 : vector<16x32xf32>
    %127 = arith.addf %0, %126 : vector<16x32xf32>
    %cst_35 = arith.constant dense<0.000000e+00> : vector<16xf32>
    %128 = vector.multi_reduction <add>, %127, %cst_35 [1] : vector<16x32xf32> to vector<16xf32>
    %129 = vector.shape_cast %128 : vector<16xf32> to vector<16x1xf32>
    %cst_36 = arith.constant 3.200000e+01 : f32
    %130 = vector.broadcast %cst_36 : f32 to vector<16x1xf32>
    %131 = arith.divf %129, %130 : vector<16x1xf32>
    %132 = vector.broadcast %131 : vector<16x1xf32> to vector<16x32xf32>
    %133 = arith.subf %127, %132 : vector<16x32xf32>
    %134 = arith.mulf %133, %133 : vector<16x32xf32>
    %cst_37 = arith.constant dense<0.000000e+00> : vector<16xf32>
    %135 = vector.multi_reduction <add>, %134, %cst_37 [1] : vector<16x32xf32> to vector<16xf32>
    %136 = vector.shape_cast %135 : vector<16xf32> to vector<16x1xf32>
    %cst_38 = arith.constant 3.200000e+01 : f32
    %137 = vector.broadcast %cst_38 : f32 to vector<16x1xf32>
    %138 = arith.divf %136, %137 : vector<16x1xf32>
    %139 = vector.broadcast %131 : vector<16x1xf32> to vector<16x32xf32>
    %140 = arith.subf %127, %139 : vector<16x32xf32>
    %cst_39 = arith.constant 9.99999974E-6 : f32
    %141 = vector.broadcast %cst_39 : f32 to vector<16x1xf32>
    %142 = arith.addf %138, %141 : vector<16x1xf32>
    %143 = math.rsqrt %142 : vector<16x1xf32>
    %144 = vector.broadcast %143 : vector<16x1xf32> to vector<16x32xf32>
    %145 = arith.mulf %140, %144 : vector<16x32xf32>
    %146 = vector.broadcast %10 : vector<1x32xf32> to vector<16x32xf32>
    %147 = arith.mulf %145, %146 : vector<16x32xf32>
    %148 = vector.broadcast %11 : vector<1x32xf32> to vector<16x32xf32>
    %149 = arith.addf %147, %148 : vector<16x32xf32>
    %cst_40 = arith.constant dense<0.000000e+00> : vector<16x64xf32>
    %150 = tpu.matmul %149, %3, %cst_40 {dimension_numbers = #tpu.dot_dimension_numbers<[1], [0], [0], [1], [0, 0, 1, 1], [], []>} : vector<16x32xf32>, vector<32x64xf32>, vector<16x64xf32> -> vector<16x64xf32>
    %151 = vector.broadcast %8 : vector<1x64xf32> to vector<16x64xf32>
    %152 = arith.addf %150, %151 : vector<16x64xf32>
    %cst_41 = arith.constant dense<0.000000e+00> : vector<16x32xf32>
    %153 = tpu.matmul %152, %4, %cst_41 {dimension_numbers = #tpu.dot_dimension_numbers<[1], [0], [0], [1], [0, 0, 1, 1], [], []>} : vector<16x64xf32>, vector<64x32xf32>, vector<16x32xf32> -> vector<16x32xf32>
    %154 = vector.broadcast %9 : vector<1x32xf32> to vector<16x32xf32>
    %155 = arith.addf %153, %154 : vector<16x32xf32>
    %156 = arith.addf %149, %155 : vector<16x32xf32>
    %cst_42 = arith.constant dense<0.000000e+00> : vector<16xf32>
    %157 = vector.multi_reduction <add>, %156, %cst_42 [1] : vector<16x32xf32> to vector<16xf32>
    %158 = vector.shape_cast %157 : vector<16xf32> to vector<16x1xf32>
    %cst_43 = arith.constant 3.200000e+01 : f32
    %159 = vector.broadcast %cst_43 : f32 to vector<16x1xf32>
    %160 = arith.divf %158, %159 : vector<16x1xf32>
    %161 = vector.broadcast %160 : vector<16x1xf32> to vector<16x32xf32>
    %162 = arith.subf %156, %161 : vector<16x32xf32>
    %163 = arith.mulf %162, %162 : vector<16x32xf32>
    %cst_44 = arith.constant dense<0.000000e+00> : vector<16xf32>
    %164 = vector.multi_reduction <add>, %163, %cst_44 [1] : vector<16x32xf32> to vector<16xf32>
    %165 = vector.shape_cast %164 : vector<16xf32> to vector<16x1xf32>
    %cst_45 = arith.constant 3.200000e+01 : f32
    %166 = vector.broadcast %cst_45 : f32 to vector<16x1xf32>
    %167 = arith.divf %165, %166 : vector<16x1xf32>
    %168 = vector.broadcast %160 : vector<16x1xf32> to vector<16x32xf32>
    %169 = arith.subf %156, %168 : vector<16x32xf32>
    %cst_46 = arith.constant 9.99999974E-6 : f32
    %170 = vector.broadcast %cst_46 : f32 to vector<16x1xf32>
    %171 = arith.addf %167, %170 : vector<16x1xf32>
    %172 = math.rsqrt %171 : vector<16x1xf32>
    %173 = vector.broadcast %172 : vector<16x1xf32> to vector<16x32xf32>
    %174 = arith.mulf %169, %173 : vector<16x32xf32>
    %175 = vector.broadcast %12 : vector<1x32xf32> to vector<16x32xf32>
    %176 = arith.mulf %174, %175 : vector<16x32xf32>
    %177 = vector.broadcast %13 : vector<1x32xf32> to vector<16x32xf32>
    %178 = arith.addf %176, %177 : vector<16x32xf32>
    %c0_47 = arith.constant 0 : index
    %c0_48 = arith.constant 0 : index
    %179 = vector.load %arg2[%c0_47, %c0_48] : memref<16x32xf32, #tpu.memory_space<vmem>>, vector<16x32xf32>
    tpu.vector_store %arg2[%c0_47, %c0_48], %178 {strides = array<i32>} : memref<16x32xf32, #tpu.memory_space<vmem>>, vector<16x32xf32>,
    return
  }
}

</mosaic_0001>

<llo_original>
// kernel: ekd_transformer_layer.1
$region0: #{ekd_transformer_layer.1}
  #allocation0 [shape = 'u32[]', space=smem, size = 0x4, offset = 0x4, fixed_abs, tag = 'smem constant byte address 0x4 - core index']
  #allocation1 [shape = 'u32[144,128]{1,0:T(1,128)}', space=vmem, size = 0x12000, scoped, tag = 'internal scratch']
  %s0 = inlined_call_operand.hbm [shape: f32[16,32], index: 0, kind: input, shape index: {}]
  %s1 = inlined_call_operand.hbm [shape: f32[168,128], index: 1, kind: input, shape index: {}]
  %s2 = inlined_call_operand.hbm [shape: f32[16,32], index: 2, kind: output, shape index: {}]
  %s3 = sld [smem:[#allocation0]]
  $region26: #{ekd_transformer_layer.1} parent=0
    _
  %s5 = ssub.s32 1, %s3
  %s6 = scalar_select 0, %s5, %s3
  $region1: #{ekd_transformer_layer.1} parent=0
    #allocation2 [shape = 'u8[8192]{0}', space=vmem, size = 0x2000, scoped, tag = 'input window, operand 0, single buffered']
    #allocation3 [shape = 's32[1]{0}', space=sflag, size = 0x4, scoped, tag = 'scoped memory for ekd_transformer_layer.1']
    #allocation4 [shape = 's32[1]{0}', space=sflag, size = 0x4, scoped, tag = 'scoped memory for ekd_transformer_layer.1']
    #allocation5 [shape = 'u8[86016]{0}', space=vmem, size = 0x15000, scoped, tag = 'input window, operand 1, single buffered']
    #allocation6 [shape = 's32[1]{0}', space=sflag, size = 0x4, scoped, tag = 'scoped memory for ekd_transformer_layer.1']
    #allocation7 [shape = 'u8[8192]{0}', space=vmem, size = 0x2000, scoped, tag = 'output window, operand 0, single buffered']
    %7 = vsyncpa [#allocation3], 0
    %8 = vsyncpa [#allocation6], 0
    %9 = vsyncpa [#allocation4], 0
    // Predicated region
    $region2: #{ekd_transformer_layer.1} parent=1 // pred_check
      _
    $region3: #{ekd_transformer_layer.1} parent=1 // pred_check_branch
      %11 = sbr.rel (0) target = $region5
    $region4: #{ekd_transformer_layer.1} parent=1 // pred_region
      %s13 = ssub.s32 256, 256
      %14 = vsyncadd [#allocation3], %s13
      %s15 = sshll.u32 [#allocation2], 4
      %s16 = int_to_ptr.vmem [resolvable:$true] %s15
      %21 = dma.hbm_to_vmem [thread:$0]  %s0, 256, %s16, [#allocation3], 128, 128, 8
    $region5: #{ekd_transformer_layer.1} parent=1 // pred_fallthru
      _
    // Predicated region
    $region6: #{ekd_transformer_layer.1} parent=1 // pred_check
      _
    $region7: #{ekd_transformer_layer.1} parent=1 // pred_check_branch
      %23 = sbr.rel (0) target = $region9
    $region8: #{ekd_transformer_layer.1} parent=1 // pred_region
      %s25 = ssub.s32 2688, 2688
      %26 = vsyncadd [#allocation6], %s25
      %s27 = sshll.u32 [#allocation5], 4
      %s28 = int_to_ptr.vmem [resolvable:$true] %s27
      %33 = dma.hbm_to_vmem [thread:$0]  %s1, 2688, %s28, [#allocation6], 128, 128, 8
    $region9: #{ekd_transformer_layer.1} parent=1 // pred_fallthru
      _
    // Predicated region
    $region10: #{ekd_transformer_layer.1} parent=1 // pred_check
      _
    $region11: #{ekd_transformer_layer.1} parent=1 // pred_check_branch
      %35 = sbr.rel (0) target = $region13
    $region12: #{ekd_transformer_layer.1} parent=1 // pred_region
      %36 = dma.done [#allocation3], 256
    $region13: #{ekd_transformer_layer.1} parent=1 // pred_fallthru
      _
    // Predicated region
    $region14: #{ekd_transformer_layer.1} parent=1 // pred_check
      _
    $region15: #{ekd_transformer_layer.1} parent=1 // pred_check_branch
      %38 = sbr.rel (0) target = $region17
    $region16: #{ekd_transformer_layer.1} parent=1 // pred_region
      %39 = dma.done [#allocation6], 2688
    $region17: #{ekd_transformer_layer.1} parent=1 // pred_fallthru
      _
    %v40 = vld [vmem:[#allocation2] sm:$0xff]
    %v41 = vld [vmem:[#allocation2 + $0x8] sm:$0xff]
    %v42 = vld [vmem:[#allocation5] sm:$0xff]
    %v43 = vld [vmem:[#allocation5 + $0x8] sm:$0xff]
    %v44 = vld [vmem:[#allocation5 + $0x10] sm:$0xff]
    %v45 = vld [vmem:[#allocation5 + $0x18] sm:$0xff]
    %v46 = vld [vmem:[#allocation5 + $0x20] sm:$0xff]
    %v47 = vld [vmem:[#allocation5 + $0x28] sm:$0xff]
    %v48 = vld [vmem:[#allocation5 + $0x30] sm:$0xff]
    %v49 = vld [vmem:[#allocation5 + $0x38] sm:$0xff]
    %v50 = vld [vmem:[#allocation5 + $0x40] sm:$0xff]
    %v51 = vld [vmem:[#allocation5 + $0x48] sm:$0xff]
    %v52 = vld [vmem:[#allocation5 + $0x50] sm:$0xff]
    %v53 = vld [vmem:[#allocation5 + $0x58] sm:$0xff]
    %v54 = vld [vmem:[#allocation5 + $0x60] sm:$0xff]
    %v55 = vld [vmem:[#allocation5 + $0x68] sm:$0xff]
    %v56 = vld [vmem:[#allocation5 + $0x70] sm:$0xff]
    %v57 = vld [vmem:[#allocation5 + $0x78] sm:$0xff]
    %v58 = vld [vmem:[#allocation5 + $0x80] sm:$0xff]
    %v59 = vld [vmem:[#allocation5 + $0x88] sm:$0xff]
    %v60 = vld [vmem:[#allocation5 + $0x90] sm:$0xff]
    %v61 = vld [vmem:[#allocation5 + $0x98] sm:$0xff]
    %v62 = vld [vmem:[#allocation5 + $0xa0] sm:$0xff]
    %v63 = vlaneseq
    %v64 = vshrl.u32 %v63, 7
    %v65 = vsub.s32 0, %v64
    %v66 = vrot.slane %v62, %v65
    %vm67 = vcmask 261120
    %v69 = vsel %vm67, %v40, 0
    %v72 = vsel %vm67, %v41, 0
    %74 = vmatprep.subr.mxu0 0.0
    %75 = vmatpush1.msra.mxu0 0.0
    %76 = vmatprep.subr.mxu0 0.0
    %77 = vmatpush1.msra.mxu0 0.0
    %78 = vmatprep.subr.mxu0 0.0
    %79 = vmatpush1.msra.mxu0 0.0
    %80 = vmatprep.subr.mxu0 0.0
    %81 = vmatpush1.msra.mxu0 0.0
    %82 = vmatprep.subr.mxu0 0.0
    %83 = vmatpush1.msra.mxu0 0.0
    %84 = vmatprep.subr.mxu0 0.0
    %85 = vmatpush1.msra.mxu0 0.0
    %86 = vmatprep.subr.mxu0 0.0
    %87 = vmatpush1.msra.mxu0 0.0
    %88 = vmatprep.subr.mxu0 0.0
    %89 = vmatpush1.msra.mxu0 0.0
    %90 = vmatprep.subr.mxu0 0.0
    %91 = vmatpush1.msra.mxu0 0.0
    %92 = vmatprep.subr.mxu0 0.0
    %93 = vmatpush1.msra.mxu0 0.0
    %94 = vmatprep.subr.mxu0 0.0
    %95 = vmatpush1.msra.mxu0 0.0
    %96 = vmatprep.subr.mxu0 0.0
    %97 = vmatpush1.msra.mxu0 0.0
    %98 = vmatprep.subr.mxu0 0.0
    %99 = vmatpush1.msra.mxu0 %v45
    %100 = vmatprep.subr.mxu0 0.0
    %101 = vmatpush1.msra.mxu0 %v44
    %102 = vmatprep.subr.mxu0 0.0
    %103 = vmatpush1.msra.mxu0 %v43
    %104 = vmatprep.subr.mxu0 0.0
    %105 = vmatpush1.msra.mxu0 %v42
    %106 = vmatprep.subr.mxu0 0.0
    %107 = vmatpush2.msra.mxu0 0.0
    %108 = vmatprep.subr.mxu0 0.0
    %109 = vmatpush2.msra.mxu0 0.0
    %110 = vmatprep.subr.mxu0 0.0
    %111 = vmatpush2.msra.mxu0 0.0
    %112 = vmatprep.subr.mxu0 0.0
    %113 = vmatpush2.msra.mxu0 0.0
    %114 = vmatprep.subr.mxu0 0.0
    %115 = vmatpush2.msra.mxu0 0.0
    %116 = vmatprep.subr.mxu0 0.0
    %117 = vmatpush2.msra.mxu0 0.0
    %118 = vmatprep.subr.mxu0 0.0
    %119 = vmatpush2.msra.mxu0 0.0
    %120 = vmatprep.subr.mxu0 0.0
    %121 = vmatpush2.msra.mxu0 0.0
    %122 = vmatprep.subr.mxu0 0.0
    %123 = vmatpush2.msra.mxu0 0.0
    %124 = vmatprep.subr.mxu0 0.0
    %125 = vmatpush2.msra.mxu0 0.0
    %126 = vmatprep.subr.mxu0 0.0
    %127 = vmatpush2.msra.mxu0 0.0
    %128 = vmatprep.subr.mxu0 0.0
    %129 = vmatpush2.msra.mxu0 0.0
    %130 = vmatprep.subr.mxu0 0.0
    %131 = vmatpush2.msra.mxu0 0.0
    %132 = vmatprep.subr.mxu0 0.0
    %133 = vmatpush2.msra.mxu0 0.0
    %134 = vmatprep.subr.mxu0 0.0
    %135 = vmatpush2.msra.mxu0 0.0
    %136 = vmatprep.subr.mxu0 0.0
    %137 = vmatpush2.msra.mxu0 0.0
    %138 = vmatprep.mubr.f32.mxu0 0.0
    %139 = vmatmul.mubr.f32.gmra.mxu0 %v69
    %v140 = vpop.f32.mrf.mxu0
    %v141 = vadd.f32 %v66, %v140
    %v142 = vpop.f32.mrf.mxu0
    %143 = vmatprep.mubr.f32.mxu0 0.0
    %144 = vmatmul.mubr.f32.gmra.mxu0 %v72
    %v145 = vpop.f32.mrf.mxu0
    %v146 = vadd.f32 %v66, %v145
    %v147 = vpop.f32.mrf.mxu0
    %148 = vdwg.mxu0
    %v149 = vlaneseq
    %v150 = vshrl.u32 %v149, 7
    %v151 = vadd.s32 %v150, 8
    %vm152 = vcmp.lt.s32.totalorder %v150, 0
    %v153 = vsub.s32 0, %v150
    %v154 = vsel %vm152, %v153, %v150
    %v155 = vshrl.u32 %v154, 1
    %v156 = vand.u32 %v154, 1
    %v157 = vsub.s32 0, %v156
    %v158 = vsel %vm152, %v157, %v156
    %vm159 = vcmp.lt.s32.totalorder %v151, 0
    %v160 = vsub.s32 0, %v151
    %v161 = vsel %vm159, %v160, %v151
    %v162 = vshrl.u32 %v161, 1
    %v163 = vand.u32 %v161, 1
    %v164 = vsub.s32 0, %v163
    %v165 = vsel %vm159, %v164, %v163
    %vm166 = vcmp.ne.s32.totalorder %v158, 0
    %vm167 = vcmp.ne.s32.totalorder %v165, 0
    %vm168 = vcmp.lt.s32.totalorder %v158, 0
    %vm169 = vcmp.lt.s32.totalorder %v165, 0
    %vm170 = vmand %vm168, %vm166
    %vm171 = vmand %vm169, %vm167
    %v172 = vadd.s32 %v158, 2
    %v173 = vadd.s32 %v165, 2
    %v174 = vsel %vm170, %v172, %v158
    %v175 = vsel %vm171, %v173, %v165
    %v176 = vlaneseq
    %v177 = vand.u32 %v176, 127
    %vm178 = vcmp.lt.s32.totalorder %v177, 0
    %v179 = vsub.s32 0, %v177
    %v180 = vsel %vm178, %v179, %v177
    %v181 = vshrl.u32 %v180, 1
    %v182 = vand.u32 %v180, 1
    %v183 = vsub.s32 0, %v182
    %v184 = vsel %vm178, %v183, %v182
    %vm185 = vcmp.ne.s32.totalorder %v184, 0
    %vm186 = vcmp.lt.s32.totalorder %v184, 0
    %vm187 = vmand %vm186, %vm185
    %v188 = vadd.s32 %v184, 2
    %v189 = vsel %vm187, %v188, %v184
    %vm190 = vcmp.eq.s32.totalorder %v174, %v189
    %vm191 = vcmp.eq.s32.totalorder %v175, %v189
    %v192 = vsel %vm190, 0.0, -1e+30
    %v193 = vsel %vm191, 0.0, -1e+30
    %196 = vrot.lane.b32.xlu0 %v141, 96
    %v197 = vpop.permute.xlu0 %196
    %198 = vrot.lane.b32.xlu0 %v146, 96
    %v199 = vpop.permute.xlu0 %198
    %vm200 = vcmask 64512
    %v201 = vsel %vm200, %v141, 0
    %v203 = vsel %vm200, %v146, 0
    %v205 = vsel %vm200, %v197, 0
    %v207 = vsel %vm200, %v199, 0
    %209 = vmatprep.subr.mxu0 0.0
    %210 = vmatpush1.xpose.msra.mxu0 0.0
    %211 = vmatprep.subr.mxu0 0.0
    %212 = vmatpush1.xpose.msra.mxu0 0.0
    %213 = vmatprep.subr.mxu0 0.0
    %214 = vmatpush1.xpose.msra.mxu0 0.0
    %215 = vmatprep.subr.mxu0 0.0
    %216 = vmatpush1.xpose.msra.mxu0 0.0
    %217 = vmatprep.subr.mxu0 0.0
    %218 = vmatpush1.xpose.msra.mxu0 0.0
    %219 = vmatprep.subr.mxu0 0.0
    %220 = vmatpush1.xpose.msra.mxu0 0.0
    %221 = vmatprep.subr.mxu0 0.0
    %222 = vmatpush1.xpose.msra.mxu0 0.0
    %223 = vmatprep.subr.mxu0 0.0
    %224 = vmatpush1.xpose.msra.mxu0 0.0
    %225 = vmatprep.subr.mxu0 0.0
    %226 = vmatpush1.xpose.msra.mxu0 0.0
    %227 = vmatprep.subr.mxu0 0.0
    %228 = vmatpush1.xpose.msra.mxu0 0.0
    %229 = vmatprep.subr.mxu0 0.0
    %230 = vmatpush1.xpose.msra.mxu0 0.0
    %231 = vmatprep.subr.mxu0 0.0
    %232 = vmatpush1.xpose.msra.mxu0 0.0
    %233 = vmatprep.subr.mxu0 0.0
    %234 = vmatpush1.xpose.msra.mxu0 0.0
    %235 = vmatprep.subr.mxu0 0.0
    %236 = vmatpush1.xpose.msra.mxu0 0.0
    %237 = vmatprep.subr.mxu0 0.0
    %238 = vmatpush1.xpose.msra.mxu0 %v207
    %239 = vmatprep.subr.mxu0 0.0
    %240 = vmatpush1.xpose.msra.mxu0 %v205
    %241 = vmatprep.subr.mxu0 0.0
    %242 = vmatpush2.xpose.msra.mxu0 0.0
    %243 = vmatprep.subr.mxu0 0.0
    %244 = vmatpush2.xpose.msra.mxu0 0.0
    %245 = vmatprep.subr.mxu0 0.0
    %246 = vmatpush2.xpose.msra.mxu0 0.0
    %247 = vmatprep.subr.mxu0 0.0
    %248 = vmatpush2.xpose.msra.mxu0 0.0
    %249 = vmatprep.subr.mxu0 0.0
    %250 = vmatpush2.xpose.msra.mxu0 0.0
    %251 = vmatprep.subr.mxu0 0.0
    %252 = vmatpush2.xpose.msra.mxu0 0.0
    %253 = vmatprep.subr.mxu0 0.0
    %254 = vmatpush2.xpose.msra.mxu0 0.0
    %255 = vmatprep.subr.mxu0 0.0
    %256 = vmatpush2.xpose.msra.mxu0 0.0
    %257 = vmatprep.subr.mxu0 0.0
    %258 = vmatpush2.xpose.msra.mxu0 0.0
    %259 = vmatprep.subr.mxu0 0.0
    %260 = vmatpush2.xpose.msra.mxu0 0.0
    %261 = vmatprep.subr.mxu0 0.0
    %262 = vmatpush2.xpose.msra.mxu0 0.0
    %263 = vmatprep.subr.mxu0 0.0
    %264 = vmatpush2.xpose.msra.mxu0 0.0
    %265 = vmatprep.subr.mxu0 0.0
    %266 = vmatpush2.xpose.msra.mxu0 0.0
    %267 = vmatprep.subr.mxu0 0.0
    %268 = vmatpush2.xpose.msra.mxu0 0.0
    %269 = vmatprep.subr.mxu0 0.0
    %270 = vmatpush2.xpose.msra.mxu0 0.0
    %271 = vmatprep.subr.mxu0 0.0
    %272 = vmatpush2.xpose.msra.mxu0 0.0
    %273 = vmatprep.mubr.f32.mxu0 0.0
    %274 = vmatmul.mubr.f32.gmra.mxu0 %v201
    %v275 = vpop.f32.mrf.mxu0
    %v276 = vadd.f32 %v192, %v275
    %v277 = vpop.f32.mrf.mxu0
    %278 = vmatprep.mubr.f32.mxu0 0.0
    %279 = vmatmul.mubr.f32.gmra.mxu0 %v203
    %v280 = vpop.f32.mrf.mxu0
    %v281 = vadd.f32 %v193, %v280
    %v282 = vpop.f32.mrf.mxu0
    %283 = vdwg.mxu0
    %vm284 = vcmask 130048
    %v285 = vsel %vm284, %v276, -inf
    %286 = vmax.xlane.f32.xlu0 %v285
    %v287 = vpop.xlane.xlu0 %286
    %v288 = vsel %vm284, %v281, -inf
    %289 = vmax.xlane.f32.xlu0 %v288
    %v290 = vpop.xlane.xlu0 %289
    %v291 = vsub.f32 %v276, %v287
    %v292 = vsub.f32 %v281, %v290
    %v293 = vmul.f32 %v291, 1.442695
    %v294 = vpow.pop %v293
    %v295 = vmul.f32 %v292, 1.442695
    %v296 = vpow.pop %v295
    %v297 = vsel %vm284, %v294, 0.0
    %298 = vadd.xlane.f32.xlu0 %v297
    %v299 = vpop.xlane.xlu0 %298
    %v300 = vsel %vm284, %v296, 0.0
    %301 = vadd.xlane.f32.xlu0 %v300
    %v302 = vpop.xlane.xlu0 %301
    %v303 = vrcp.pop %v299
    %v304 = vrcp.pop %v302
    %v305 = vmul.f32 %v294, %v303
    %v306 = vmul.f32 %v296, %v304
    %307 = vrot.lane.b32.xlu0 %v141, 64
    %v308 = vpop.permute.xlu0 %307
    %309 = vrot.lane.b32.xlu0 %v146, 64
    %v310 = vpop.permute.xlu0 %309
    %v314 = vsel %vm284, %v305, 0
    %v317 = vsel %vm284, %v306, 0
    %319 = vmatprep.subr.mxu0 0.0
    %320 = vmatpush1.msra.mxu0 0.0
    %321 = vmatprep.subr.mxu0 0.0
    %322 = vmatpush1.msra.mxu0 0.0
    %323 = vmatprep.subr.mxu0 0.0
    %324 = vmatpush1.msra.mxu0 0.0
    %325 = vmatprep.subr.mxu0 0.0
    %326 = vmatpush1.msra.mxu0 0.0
    %327 = vmatprep.subr.mxu0 0.0
    %328 = vmatpush1.msra.mxu0 0.0
    %329 = vmatprep.subr.mxu0 0.0
    %330 = vmatpush1.msra.mxu0 0.0
    %331 = vmatprep.subr.mxu0 0.0
    %332 = vmatpush1.msra.mxu0 0.0
    %333 = vmatprep.subr.mxu0 0.0
    %334 = vmatpush1.msra.mxu0 0.0
    %335 = vmatprep.subr.mxu0 0.0
    %336 = vmatpush1.msra.mxu0 0.0
    %337 = vmatprep.subr.mxu0 0.0
    %338 = vmatpush1.msra.mxu0 0.0
    %339 = vmatprep.subr.mxu0 0.0
    %340 = vmatpush1.msra.mxu0 0.0
    %341 = vmatprep.subr.mxu0 0.0
    %342 = vmatpush1.msra.mxu0 0.0
    %343 = vmatprep.subr.mxu0 0.0
    %344 = vmatpush1.msra.mxu0 0.0
    %345 = vmatprep.subr.mxu0 0.0
    %346 = vmatpush1.msra.mxu0 0.0
    %347 = vmatprep.subr.mxu0 0.0
    %348 = vmatpush1.msra.mxu0 %v310
    %349 = vmatprep.subr.mxu0 0.0
    %350 = vmatpush1.msra.mxu0 %v308
    %351 = vmatprep.subr.mxu0 0.0
    %352 = vmatpush2.msra.mxu0 0.0
    %353 = vmatprep.subr.mxu0 0.0
    %354 = vmatpush2.msra.mxu0 0.0
    %355 = vmatprep.subr.mxu0 0.0
    %356 = vmatpush2.msra.mxu0 0.0
    %357 = vmatprep.subr.mxu0 0.0
    %358 = vmatpush2.msra.mxu0 0.0
    %359 = vmatprep.subr.mxu0 0.0
    %360 = vmatpush2.msra.mxu0 0.0
    %361 = vmatprep.subr.mxu0 0.0
    %362 = vmatpush2.msra.mxu0 0.0
    %363 = vmatprep.subr.mxu0 0.0
    %364 = vmatpush2.msra.mxu0 0.0
    %365 = vmatprep.subr.mxu0 0.0
    %366 = vmatpush2.msra.mxu0 0.0
    %367 = vmatprep.subr.mxu0 0.0
    %368 = vmatpush2.msra.mxu0 0.0
    %369 = vmatprep.subr.mxu0 0.0
    %370 = vmatpush2.msra.mxu0 0.0
    %371 = vmatprep.subr.mxu0 0.0
    %372 = vmatpush2.msra.mxu0 0.0
    %373 = vmatprep.subr.mxu0 0.0
    %374 = vmatpush2.msra.mxu0 0.0
    %375 = vmatprep.subr.mxu0 0.0
    %376 = vmatpush2.msra.mxu0 0.0
    %377 = vmatprep.subr.mxu0 0.0
    %378 = vmatpush2.msra.mxu0 0.0
    %379 = vmatprep.subr.mxu0 0.0
    %380 = vmatpush2.msra.mxu0 0.0
    %381 = vmatprep.subr.mxu0 0.0
    %382 = vmatpush2.msra.mxu0 0.0
    %383 = vmatprep.mubr.f32.mxu0 0.0
    %384 = vmatmul.mubr.f32.gmra.mxu0 %v314
    %v385 = vpop.f32.mrf.mxu0
    %v386 = vadd.f32 0.0, %v385
    %v387 = vpop.f32.mrf.mxu0
    %388 = vmatprep.mubr.f32.mxu0 0.0
    %389 = vmatmul.mubr.f32.gmra.mxu0 %v317
    %v390 = vpop.f32.mrf.mxu0
    %v391 = vadd.f32 0.0, %v390
    %v392 = vpop.f32.mrf.mxu0
    %393 = vdwg.mxu0
    %394 = vrot.lane.b32.xlu0 %v141, 120
    %v395 = vpop.permute.xlu0 %394
    %396 = vrot.lane.b32.xlu0 %v146, 120
    %v397 = vpop.permute.xlu0 %396
    %398 = vrot.lane.b32.xlu0 %v141, 88
    %v399 = vpop.permute.xlu0 %398
    %400 = vrot.lane.b32.xlu0 %v146, 88
    %v401 = vpop.permute.xlu0 %400
    %v402 = vsel %vm200, %v395, 0
    %v404 = vsel %vm200, %v397, 0
    %v406 = vsel %vm200, %v399, 0
    %v408 = vsel %vm200, %v401, 0
    %410 = vmatprep.subr.mxu0 0.0
    %411 = vmatpush1.xpose.msra.mxu0 0.0
    %412 = vmatprep.subr.mxu0 0.0
    %413 = vmatpush1.xpose.msra.mxu0 0.0
    %414 = vmatprep.subr.mxu0 0.0
    %415 = vmatpush1.xpose.msra.mxu0 0.0
    %416 = vmatprep.subr.mxu0 0.0
    %417 = vmatpush1.xpose.msra.mxu0 0.0
    %418 = vmatprep.subr.mxu0 0.0
    %419 = vmatpush1.xpose.msra.mxu0 0.0
    %420 = vmatprep.subr.mxu0 0.0
    %421 = vmatpush1.xpose.msra.mxu0 0.0
    %422 = vmatprep.subr.mxu0 0.0
    %423 = vmatpush1.xpose.msra.mxu0 0.0
    %424 = vmatprep.subr.mxu0 0.0
    %425 = vmatpush1.xpose.msra.mxu0 0.0
    %426 = vmatprep.subr.mxu0 0.0
    %427 = vmatpush1.xpose.msra.mxu0 0.0
    %428 = vmatprep.subr.mxu0 0.0
    %429 = vmatpush1.xpose.msra.mxu0 0.0
    %430 = vmatprep.subr.mxu0 0.0
    %431 = vmatpush1.xpose.msra.mxu0 0.0
    %432 = vmatprep.subr.mxu0 0.0
    %433 = vmatpush1.xpose.msra.mxu0 0.0
    %434 = vmatprep.subr.mxu0 0.0
    %435 = vmatpush1.xpose.msra.mxu0 0.0
    %436 = vmatprep.subr.mxu0 0.0
    %437 = vmatpush1.xpose.msra.mxu0 0.0
    %438 = vmatprep.subr.mxu0 0.0
    %439 = vmatpush1.xpose.msra.mxu0 %v408
    %440 = vmatprep.subr.mxu0 0.0
    %441 = vmatpush1.xpose.msra.mxu0 %v406
    %442 = vmatprep.subr.mxu0 0.0
    %443 = vmatpush2.xpose.msra.mxu0 0.0
    %444 = vmatprep.subr.mxu0 0.0
    %445 = vmatpush2.xpose.msra.mxu0 0.0
    %446 = vmatprep.subr.mxu0 0.0
    %447 = vmatpush2.xpose.msra.mxu0 0.0
    %448 = vmatprep.subr.mxu0 0.0
    %449 = vmatpush2.xpose.msra.mxu0 0.0
    %450 = vmatprep.subr.mxu0 0.0
    %451 = vmatpush2.xpose.msra.mxu0 0.0
    %452 = vmatprep.subr.mxu0 0.0
    %453 = vmatpush2.xpose.msra.mxu0 0.0
    %454 = vmatprep.subr.mxu0 0.0
    %455 = vmatpush2.xpose.msra.mxu0 0.0
    %456 = vmatprep.subr.mxu0 0.0
    %457 = vmatpush2.xpose.msra.mxu0 0.0
    %458 = vmatprep.subr.mxu0 0.0
    %459 = vmatpush2.xpose.msra.mxu0 0.0
    %460 = vmatprep.subr.mxu0 0.0
    %461 = vmatpush2.xpose.msra.mxu0 0.0
    %462 = vmatprep.subr.mxu0 0.0
    %463 = vmatpush2.xpose.msra.mxu0 0.0
    %464 = vmatprep.subr.mxu0 0.0
    %465 = vmatpush2.xpose.msra.mxu0 0.0
    %466 = vmatprep.subr.mxu0 0.0
    %467 = vmatpush2.xpose.msra.mxu0 0.0
    %468 = vmatprep.subr.mxu0 0.0
    %469 = vmatpush2.xpose.msra.mxu0 0.0
    %470 = vmatprep.subr.mxu0 0.0
    %471 = vmatpush2.xpose.msra.mxu0 0.0
    %472 = vmatprep.subr.mxu0 0.0
    %473 = vmatpush2.xpose.msra.mxu0 0.0
    %474 = vmatprep.mubr.f32.mxu0 0.0
    %475 = vmatmul.mubr.f32.gmra.mxu0 %v402
    %v476 = vpop.f32.mrf.mxu0
    %v477 = vadd.f32 %v192, %v476
    %v478 = vpop.f32.mrf.mxu0
    %479 = vmatprep.mubr.f32.mxu0 0.0
    %480 = vmatmul.mubr.f32.gmra.mxu0 %v404
    %v481 = vpop.f32.mrf.mxu0
    %v482 = vadd.f32 %v193, %v481
    %v483 = vpop.f32.mrf.mxu0
    %484 = vdwg.mxu0
    %v485 = vsel %vm284, %v477, -inf
    %486 = vmax.xlane.f32.xlu0 %v485
    %v487 = vpop.xlane.xlu0 %486
    %v488 = vsel %vm284, %v482, -inf
    %489 = vmax.xlane.f32.xlu0 %v488
    %v490 = vpop.xlane.xlu0 %489
    %v491 = vsub.f32 %v477, %v487
    %v492 = vsub.f32 %v482, %v490
    %v493 = vmul.f32 %v491, 1.442695
    %v494 = vpow.pop %v493
    %v495 = vmul.f32 %v492, 1.442695
    %v496 = vpow.pop %v495
    %v497 = vsel %vm284, %v494, 0.0
    %498 = vadd.xlane.f32.xlu0 %v497
    %v499 = vpop.xlane.xlu0 %498
    %v500 = vsel %vm284, %v496, 0.0
    %501 = vadd.xlane.f32.xlu0 %v500
    %v502 = vpop.xlane.xlu0 %501
    %v503 = vrcp.pop %v499
    %v504 = vrcp.pop %v502
    %v505 = vmul.f32 %v494, %v503
    %v506 = vmul.f32 %v496, %v504
    %507 = vrot.lane.b32.xlu0 %v141, 56
    %v508 = vpop.permute.xlu0 %507
    %509 = vrot.lane.b32.xlu0 %v146, 56
    %v510 = vpop.permute.xlu0 %509
    %v514 = vsel %vm284, %v505, 0
    %v517 = vsel %vm284, %v506, 0
    %519 = vmatprep.subr.mxu0 0.0
    %520 = vmatpush1.msra.mxu0 0.0
    %521 = vmatprep.subr.mxu0 0.0
    %522 = vmatpush1.msra.mxu0 0.0
    %523 = vmatprep.subr.mxu0 0.0
    %524 = vmatpush1.msra.mxu0 0.0
    %525 = vmatprep.subr.mxu0 0.0
    %526 = vmatpush1.msra.mxu0 0.0
    %527 = vmatprep.subr.mxu0 0.0
    %528 = vmatpush1.msra.mxu0 0.0
    %529 = vmatprep.subr.mxu0 0.0
    %530 = vmatpush1.msra.mxu0 0.0
    %531 = vmatprep.subr.mxu0 0.0
    %532 = vmatpush1.msra.mxu0 0.0
    %533 = vmatprep.subr.mxu0 0.0
    %534 = vmatpush1.msra.mxu0 0.0
    %535 = vmatprep.subr.mxu0 0.0
    %536 = vmatpush1.msra.mxu0 0.0
    %537 = vmatprep.subr.mxu0 0.0
    %538 = vmatpush1.msra.mxu0 0.0
    %539 = vmatprep.subr.mxu0 0.0
    %540 = vmatpush1.msra.mxu0 0.0
    %541 = vmatprep.subr.mxu0 0.0
    %542 = vmatpush1.msra.mxu0 0.0
    %543 = vmatprep.subr.mxu0 0.0
    %544 = vmatpush1.msra.mxu0 0.0
    %545 = vmatprep.subr.mxu0 0.0
    %546 = vmatpush1.msra.mxu0 0.0
    %547 = vmatprep.subr.mxu0 0.0
    %548 = vmatpush1.msra.mxu0 %v510
    %549 = vmatprep.subr.mxu0 0.0
    %550 = vmatpush1.msra.mxu0 %v508
    %551 = vmatprep.subr.mxu0 0.0
    %552 = vmatpush2.msra.mxu0 0.0
    %553 = vmatprep.subr.mxu0 0.0
    %554 = vmatpush2.msra.mxu0 0.0
    %555 = vmatprep.subr.mxu0 0.0
    %556 = vmatpush2.msra.mxu0 0.0
    %557 = vmatprep.subr.mxu0 0.0
    %558 = vmatpush2.msra.mxu0 0.0
    %559 = vmatprep.subr.mxu0 0.0
    %560 = vmatpush2.msra.mxu0 0.0
    %561 = vmatprep.subr.mxu0 0.0
    %562 = vmatpush2.msra.mxu0 0.0
    %563 = vmatprep.subr.mxu0 0.0
    %564 = vmatpush2.msra.mxu0 0.0
    %565 = vmatprep.subr.mxu0 0.0
    %566 = vmatpush2.msra.mxu0 0.0
    %567 = vmatprep.subr.mxu0 0.0
    %568 = vmatpush2.msra.mxu0 0.0
    %569 = vmatprep.subr.mxu0 0.0
    %570 = vmatpush2.msra.mxu0 0.0
    %571 = vmatprep.subr.mxu0 0.0
    %572 = vmatpush2.msra.mxu0 0.0
    %573 = vmatprep.subr.mxu0 0.0
    %574 = vmatpush2.msra.mxu0 0.0
    %575 = vmatprep.subr.mxu0 0.0
    %576 = vmatpush2.msra.mxu0 0.0
    %577 = vmatprep.subr.mxu0 0.0
    %578 = vmatpush2.msra.mxu0 0.0
    %579 = vmatprep.subr.mxu0 0.0
    %580 = vmatpush2.msra.mxu0 0.0
    %581 = vmatprep.subr.mxu0 0.0
    %582 = vmatpush2.msra.mxu0 0.0
    %583 = vmatprep.mubr.f32.mxu0 0.0
    %584 = vmatmul.mubr.f32.gmra.mxu0 %v514
    %v585 = vpop.f32.mrf.mxu0
    %v586 = vadd.f32 0.0, %v585
    %v587 = vpop.f32.mrf.mxu0
    %588 = vmatprep.mubr.f32.mxu0 0.0
    %589 = vmatmul.mubr.f32.gmra.mxu0 %v517
    %v590 = vpop.f32.mrf.mxu0
    %v591 = vadd.f32 0.0, %v590
    %v592 = vpop.f32.mrf.mxu0
    %593 = vdwg.mxu0
    %594 = vrot.lane.b32.xlu0 %v141, 112
    %v595 = vpop.permute.xlu0 %594
    %596 = vrot.lane.b32.xlu0 %v146, 112
    %v597 = vpop.permute.xlu0 %596
    %598 = vrot.lane.b32.xlu0 %v141, 80
    %v599 = vpop.permute.xlu0 %598
    %600 = vrot.lane.b32.xlu0 %v146, 80
    %v601 = vpop.permute.xlu0 %600
    %v602 = vsel %vm200, %v595, 0
    %v604 = vsel %vm200, %v597, 0
    %v606 = vsel %vm200, %v599, 0
    %v608 = vsel %vm200, %v601, 0
    %610 = vmatprep.subr.mxu0 0.0
    %611 = vmatpush1.xpose.msra.mxu0 0.0
    %612 = vmatprep.subr.mxu0 0.0
    %613 = vmatpush1.xpose.msra.mxu0 0.0
    %614 = vmatprep.subr.mxu0 0.0
    %615 = vmatpush1.xpose.msra.mxu0 0.0
    %616 = vmatprep.subr.mxu0 0.0
    %617 = vmatpush1.xpose.msra.mxu0 0.0
    %618 = vmatprep.subr.mxu0 0.0
    %619 = vmatpush1.xpose.msra.mxu0 0.0
    %620 = vmatprep.subr.mxu0 0.0
    %621 = vmatpush1.xpose.msra.mxu0 0.0
    %622 = vmatprep.subr.mxu0 0.0
    %623 = vmatpush1.xpose.msra.mxu0 0.0
    %624 = vmatprep.subr.mxu0 0.0
    %625 = vmatpush1.xpose.msra.mxu0 0.0
    %626 = vmatprep.subr.mxu0 0.0
    %627 = vmatpush1.xpose.msra.mxu0 0.0
    %628 = vmatprep.subr.mxu0 0.0
    %629 = vmatpush1.xpose.msra.mxu0 0.0
    %630 = vmatprep.subr.mxu0 0.0
    %631 = vmatpush1.xpose.msra.mxu0 0.0
    %632 = vmatprep.subr.mxu0 0.0
    %633 = vmatpush1.xpose.msra.mxu0 0.0
    %634 = vmatprep.subr.mxu0 0.0
    %635 = vmatpush1.xpose.msra.mxu0 0.0
    %636 = vmatprep.subr.mxu0 0.0
    %637 = vmatpush1.xpose.msra.mxu0 0.0
    %638 = vmatprep.subr.mxu0 0.0
    %639 = vmatpush1.xpose.msra.mxu0 %v608
    %640 = vmatprep.subr.mxu0 0.0
    %641 = vmatpush1.xpose.msra.mxu0 %v606
    %642 = vmatprep.subr.mxu0 0.0
    %643 = vmatpush2.xpose.msra.mxu0 0.0
    %644 = vmatprep.subr.mxu0 0.0
    %645 = vmatpush2.xpose.msra.mxu0 0.0
    %646 = vmatprep.subr.mxu0 0.0
    %647 = vmatpush2.xpose.msra.mxu0 0.0
    %648 = vmatprep.subr.mxu0 0.0
    %649 = vmatpush2.xpose.msra.mxu0 0.0
    %650 = vmatprep.subr.mxu0 0.0
    %651 = vmatpush2.xpose.msra.mxu0 0.0
    %652 = vmatprep.subr.mxu0 0.0
    %653 = vmatpush2.xpose.msra.mxu0 0.0
    %654 = vmatprep.subr.mxu0 0.0
    %655 = vmatpush2.xpose.msra.mxu0 0.0
    %656 = vmatprep.subr.mxu0 0.0
    %657 = vmatpush2.xpose.msra.mxu0 0.0
    %658 = vmatprep.subr.mxu0 0.0
    %659 = vmatpush2.xpose.msra.mxu0 0.0
    %660 = vmatprep.subr.mxu0 0.0
    %661 = vmatpush2.xpose.msra.mxu0 0.0
    %662 = vmatprep.subr.mxu0 0.0
    %663 = vmatpush2.xpose.msra.mxu0 0.0
    %664 = vmatprep.subr.mxu0 0.0
    %665 = vmatpush2.xpose.msra.mxu0 0.0
    %666 = vmatprep.subr.mxu0 0.0
    %667 = vmatpush2.xpose.msra.mxu0 0.0
    %668 = vmatprep.subr.mxu0 0.0
    %669 = vmatpush2.xpose.msra.mxu0 0.0
    %670 = vmatprep.subr.mxu0 0.0
    %671 = vmatpush2.xpose.msra.mxu0 0.0
    %672 = vmatprep.subr.mxu0 0.0
    %673 = vmatpush2.xpose.msra.mxu0 0.0
    %674 = vmatprep.mubr.f32.mxu0 0.0
    %675 = vmatmul.mubr.f32.gmra.mxu0 %v602
    %v676 = vpop.f32.mrf.mxu0
    %v677 = vadd.f32 %v192, %v676
    %v678 = vpop.f32.mrf.mxu0
    %679 = vmatprep.mubr.f32.mxu0 0.0
    %680 = vmatmul.mubr.f32.gmra.mxu0 %v604
    %v681 = vpop.f32.mrf.mxu0
    %v682 = vadd.f32 %v193, %v681
    %v683 = vpop.f32.mrf.mxu0
    %684 = vdwg.mxu0
    %v685 = vsel %vm284, %v677, -inf
    %686 = vmax.xlane.f32.xlu0 %v685
    %v687 = vpop.xlane.xlu0 %686
    %v688 = vsel %vm284, %v682, -inf
    %689 = vmax.xlane.f32.xlu0 %v688
    %v690 = vpop.xlane.xlu0 %689
    %v691 = vsub.f32 %v677, %v687
    %v692 = vsub.f32 %v682, %v690
    %v693 = vmul.f32 %v691, 1.442695
    %v694 = vpow.pop %v693
    %v695 = vmul.f32 %v692, 1.442695
    %v696 = vpow.pop %v695
    %v697 = vsel %vm284, %v694, 0.0
    %698 = vadd.xlane.f32.xlu0 %v697
    %v699 = vpop.xlane.xlu0 %698
    %v700 = vsel %vm284, %v696, 0.0
    %701 = vadd.xlane.f32.xlu0 %v700
    %v702 = vpop.xlane.xlu0 %701
    %v703 = vrcp.pop %v699
    %v704 = vrcp.pop %v702
    %v705 = vmul.f32 %v694, %v703
    %v706 = vmul.f32 %v696, %v704
    %707 = vrot.lane.b32.xlu0 %v141, 48
    %v708 = vpop.permute.xlu0 %707
    %709 = vrot.lane.b32.xlu0 %v146, 48
    %v710 = vpop.permute.xlu0 %709
    %v714 = vsel %vm284, %v705, 0
    %v717 = vsel %vm284, %v706, 0
    %719 = vmatprep.subr.mxu0 0.0
    %720 = vmatpush1.msra.mxu0 0.0
    %721 = vmatprep.subr.mxu0 0.0
    %722 = vmatpush1.msra.mxu0 0.0
    %723 = vmatprep.subr.mxu0 0.0
    %724 = vmatpush1.msra.mxu0 0.0
    %725 = vmatprep.subr.mxu0 0.0
    %726 = vmatpush1.msra.mxu0 0.0
    %727 = vmatprep.subr.mxu0 0.0
    %728 = vmatpush1.msra.mxu0 0.0
    %729 = vmatprep.subr.mxu0 0.0
    %730 = vmatpush1.msra.mxu0 0.0
    %731 = vmatprep.subr.mxu0 0.0
    %732 = vmatpush1.msra.mxu0 0.0
    %733 = vmatprep.subr.mxu0 0.0
    %734 = vmatpush1.msra.mxu0 0.0
    %735 = vmatprep.subr.mxu0 0.0
    %736 = vmatpush1.msra.mxu0 0.0
    %737 = vmatprep.subr.mxu0 0.0
    %738 = vmatpush1.msra.mxu0 0.0
    %739 = vmatprep.subr.mxu0 0.0
    %740 = vmatpush1.msra.mxu0 0.0
    %741 = vmatprep.subr.mxu0 0.0
    %742 = vmatpush1.msra.mxu0 0.0
    %743 = vmatprep.subr.mxu0 0.0
    %744 = vmatpush1.msra.mxu0 0.0
    %745 = vmatprep.subr.mxu0 0.0
    %746 = vmatpush1.msra.mxu0 0.0
    %747 = vmatprep.subr.mxu0 0.0
    %748 = vmatpush1.msra.mxu0 %v710
    %749 = vmatprep.subr.mxu0 0.0
    %750 = vmatpush1.msra.mxu0 %v708
    %751 = vmatprep.subr.mxu0 0.0
    %752 = vmatpush2.msra.mxu0 0.0
    %753 = vmatprep.subr.mxu0 0.0
    %754 = vmatpush2.msra.mxu0 0.0
    %755 = vmatprep.subr.mxu0 0.0
    %756 = vmatpush2.msra.mxu0 0.0
    %757 = vmatprep.subr.mxu0 0.0
    %758 = vmatpush2.msra.mxu0 0.0
    %759 = vmatprep.subr.mxu0 0.0
    %760 = vmatpush2.msra.mxu0 0.0
    %761 = vmatprep.subr.mxu0 0.0
    %762 = vmatpush2.msra.mxu0 0.0
    %763 = vmatprep.subr.mxu0 0.0
    %764 = vmatpush2.msra.mxu0 0.0
    %765 = vmatprep.subr.mxu0 0.0
    %766 = vmatpush2.msra.mxu0 0.0
    %767 = vmatprep.subr.mxu0 0.0
    %768 = vmatpush2.msra.mxu0 0.0
    %769 = vmatprep.subr.mxu0 0.0
    %770 = vmatpush2.msra.mxu0 0.0
    %771 = vmatprep.subr.mxu0 0.0
    %772 = vmatpush2.msra.mxu0 0.0
    %773 = vmatprep.subr.mxu0 0.0
    %774 = vmatpush2.msra.mxu0 0.0
    %775 = vmatprep.subr.mxu0 0.0
    %776 = vmatpush2.msra.mxu0 0.0
    %777 = vmatprep.subr.mxu0 0.0
    %778 = vmatpush2.msra.mxu0 0.0
    %779 = vmatprep.subr.mxu0 0.0
    %780 = vmatpush2.msra.mxu0 0.0
    %781 = vmatprep.subr.mxu0 0.0
    %782 = vmatpush2.msra.mxu0 0.0
    %783 = vmatprep.mubr.f32.mxu0 0.0
    %784 = vmatmul.mubr.f32.gmra.mxu0 %v714
    %v785 = vpop.f32.mrf.mxu0
    %v786 = vadd.f32 0.0, %v785
    %v787 = vpop.f32.mrf.mxu0
    %788 = vmatprep.mubr.f32.mxu0 0.0
    %789 = vmatmul.mubr.f32.gmra.mxu0 %v717
    %v790 = vpop.f32.mrf.mxu0
    %v791 = vadd.f32 0.0, %v790
    %v792 = vpop.f32.mrf.mxu0
    %793 = vdwg.mxu0
    %794 = vrot.lane.b32.xlu0 %v141, 104
    %v795 = vpop.permute.xlu0 %794
    %796 = vrot.lane.b32.xlu0 %v146, 104
    %v797 = vpop.permute.xlu0 %796
    %798 = vrot.lane.b32.xlu0 %v141, 72
    %v799 = vpop.permute.xlu0 %798
    %800 = vrot.lane.b32.xlu0 %v146, 72
    %v801 = vpop.permute.xlu0 %800
    %v802 = vsel %vm200, %v795, 0
    %v804 = vsel %vm200, %v797, 0
    %v806 = vsel %vm200, %v799, 0
    %v808 = vsel %vm200, %v801, 0
    %810 = vmatprep.subr.mxu0 0.0
    %811 = vmatpush1.xpose.msra.mxu0 0.0
    %812 = vmatprep.subr.mxu0 0.0
    %813 = vmatpush1.xpose.msra.mxu0 0.0
    %814 = vmatprep.subr.mxu0 0.0
    %815 = vmatpush1.xpose.msra.mxu0 0.0
    %816 = vmatprep.subr.mxu0 0.0
    %817 = vmatpush1.xpose.msra.mxu0 0.0
    %818 = vmatprep.subr.mxu0 0.0
    %819 = vmatpush1.xpose.msra.mxu0 0.0
    %820 = vmatprep.subr.mxu0 0.0
    %821 = vmatpush1.xpose.msra.mxu0 0.0
    %822 = vmatprep.subr.mxu0 0.0
    %823 = vmatpush1.xpose.msra.mxu0 0.0
    %824 = vmatprep.subr.mxu0 0.0
    %825 = vmatpush1.xpose.msra.mxu0 0.0
    %826 = vmatprep.subr.mxu0 0.0
    %827 = vmatpush1.xpose.msra.mxu0 0.0
    %828 = vmatprep.subr.mxu0 0.0
    %829 = vmatpush1.xpose.msra.mxu0 0.0
    %830 = vmatprep.subr.mxu0 0.0
    %831 = vmatpush1.xpose.msra.mxu0 0.0
    %832 = vmatprep.subr.mxu0 0.0
    %833 = vmatpush1.xpose.msra.mxu0 0.0
    %834 = vmatprep.subr.mxu0 0.0
    %835 = vmatpush1.xpose.msra.mxu0 0.0
    %836 = vmatprep.subr.mxu0 0.0
    %837 = vmatpush1.xpose.msra.mxu0 0.0
    %838 = vmatprep.subr.mxu0 0.0
    %839 = vmatpush1.xpose.msra.mxu0 %v808
    %840 = vmatprep.subr.mxu0 0.0
    %841 = vmatpush1.xpose.msra.mxu0 %v806
    %842 = vmatprep.subr.mxu0 0.0
    %843 = vmatpush2.xpose.msra.mxu0 0.0
    %844 = vmatprep.subr.mxu0 0.0
    %845 = vmatpush2.xpose.msra.mxu0 0.0
    %846 = vmatprep.subr.mxu0 0.0
    %847 = vmatpush2.xpose.msra.mxu0 0.0
    %848 = vmatprep.subr.mxu0 0.0
    %849 = vmatpush2.xpose.msra.mxu0 0.0
    %850 = vmatprep.subr.mxu0 0.0
    %851 = vmatpush2.xpose.msra.mxu0 0.0
    %852 = vmatprep.subr.mxu0 0.0
    %853 = vmatpush2.xpose.msra.mxu0 0.0
    %854 = vmatprep.subr.mxu0 0.0
    %855 = vmatpush2.xpose.msra.mxu0 0.0
    %856 = vmatprep.subr.mxu0 0.0
    %857 = vmatpush2.xpose.msra.mxu0 0.0
    %858 = vmatprep.subr.mxu0 0.0
    %859 = vmatpush2.xpose.msra.mxu0 0.0
    %860 = vmatprep.subr.mxu0 0.0
    %861 = vmatpush2.xpose.msra.mxu0 0.0
    %862 = vmatprep.subr.mxu0 0.0
    %863 = vmatpush2.xpose.msra.mxu0 0.0
    %864 = vmatprep.subr.mxu0 0.0
    %865 = vmatpush2.xpose.msra.mxu0 0.0
    %866 = vmatprep.subr.mxu0 0.0
    %867 = vmatpush2.xpose.msra.mxu0 0.0
    %868 = vmatprep.subr.mxu0 0.0
    %869 = vmatpush2.xpose.msra.mxu0 0.0
    %870 = vmatprep.subr.mxu0 0.0
    %871 = vmatpush2.xpose.msra.mxu0 0.0
    %872 = vmatprep.subr.mxu0 0.0
    %873 = vmatpush2.xpose.msra.mxu0 0.0
    %874 = vmatprep.mubr.f32.mxu0 0.0
    %875 = vmatmul.mubr.f32.gmra.mxu0 %v802
    %v876 = vpop.f32.mrf.mxu0
    %v877 = vadd.f32 %v192, %v876
    %v878 = vpop.f32.mrf.mxu0
    %879 = vmatprep.mubr.f32.mxu0 0.0
    %880 = vmatmul.mubr.f32.gmra.mxu0 %v804
    %v881 = vpop.f32.mrf.mxu0
    %v882 = vadd.f32 %v193, %v881
    %v883 = vpop.f32.mrf.mxu0
    %884 = vdwg.mxu0
    %v885 = vsel %vm284, %v877, -inf
    %886 = vmax.xlane.f32.xlu0 %v885
    %v887 = vpop.xlane.xlu0 %886
    %v888 = vsel %vm284, %v882, -inf
    %889 = vmax.xlane.f32.xlu0 %v888
    %v890 = vpop.xlane.xlu0 %889
    %v891 = vsub.f32 %v877, %v887
    %v892 = vsub.f32 %v882, %v890
    %v893 = vmul.f32 %v891, 1.442695
    %v894 = vpow.pop %v893
    %v895 = vmul.f32 %v892, 1.442695
    %v896 = vpow.pop %v895
    %v897 = vsel %vm284, %v894, 0.0
    %898 = vadd.xlane.f32.xlu0 %v897
    %v899 = vpop.xlane.xlu0 %898
    %v900 = vsel %vm284, %v896, 0.0
    %901 = vadd.xlane.f32.xlu0 %v900
    %v902 = vpop.xlane.xlu0 %901
    %v903 = vrcp.pop %v899
    %v904 = vrcp.pop %v902
    %v905 = vmul.f32 %v894, %v903
    %v906 = vmul.f32 %v896, %v904
    %907 = vrot.lane.b32.xlu0 %v141, 40
    %v908 = vpop.permute.xlu0 %907
    %909 = vrot.lane.b32.xlu0 %v146, 40
    %v910 = vpop.permute.xlu0 %909
    %v914 = vsel %vm284, %v905, 0
    %v917 = vsel %vm284, %v906, 0
    %919 = vmatprep.subr.mxu0 0.0
    %920 = vmatpush1.msra.mxu0 0.0
    %921 = vmatprep.subr.mxu0 0.0
    %922 = vmatpush1.msra.mxu0 0.0
    %923 = vmatprep.subr.mxu0 0.0
    %924 = vmatpush1.msra.mxu0 0.0
    %925 = vmatprep.subr.mxu0 0.0
    %926 = vmatpush1.msra.mxu0 0.0
    %927 = vmatprep.subr.mxu0 0.0
    %928 = vmatpush1.msra.mxu0 0.0
    %929 = vmatprep.subr.mxu0 0.0
    %930 = vmatpush1.msra.mxu0 0.0
    %931 = vmatprep.subr.mxu0 0.0
    %932 = vmatpush1.msra.mxu0 0.0
    %933 = vmatprep.subr.mxu0 0.0
    %934 = vmatpush1.msra.mxu0 0.0
    %935 = vmatprep.subr.mxu0 0.0
    %936 = vmatpush1.msra.mxu0 0.0
    %937 = vmatprep.subr.mxu0 0.0
    %938 = vmatpush1.msra.mxu0 0.0
    %939 = vmatprep.subr.mxu0 0.0
    %940 = vmatpush1.msra.mxu0 0.0
    %941 = vmatprep.subr.mxu0 0.0
    %942 = vmatpush1.msra.mxu0 0.0
    %943 = vmatprep.subr.mxu0 0.0
    %944 = vmatpush1.msra.mxu0 0.0
    %945 = vmatprep.subr.mxu0 0.0
    %946 = vmatpush1.msra.mxu0 0.0
    %947 = vmatprep.subr.mxu0 0.0
    %948 = vmatpush1.msra.mxu0 %v910
    %949 = vmatprep.subr.mxu0 0.0
    %950 = vmatpush1.msra.mxu0 %v908
    %951 = vmatprep.subr.mxu0 0.0
    %952 = vmatpush2.msra.mxu0 0.0
    %953 = vmatprep.subr.mxu0 0.0
    %954 = vmatpush2.msra.mxu0 0.0
    %955 = vmatprep.subr.mxu0 0.0
    %956 = vmatpush2.msra.mxu0 0.0
    %957 = vmatprep.subr.mxu0 0.0
    %958 = vmatpush2.msra.mxu0 0.0
    %959 = vmatprep.subr.mxu0 0.0
    %960 = vmatpush2.msra.mxu0 0.0
    %961 = vmatprep.subr.mxu0 0.0
    %962 = vmatpush2.msra.mxu0 0.0
    %963 = vmatprep.subr.mxu0 0.0
    %964 = vmatpush2.msra.mxu0 0.0
    %965 = vmatprep.subr.mxu0 0.0
    %966 = vmatpush2.msra.mxu0 0.0
    %967 = vmatprep.subr.mxu0 0.0
    %968 = vmatpush2.msra.mxu0 0.0
    %969 = vmatprep.subr.mxu0 0.0
    %970 = vmatpush2.msra.mxu0 0.0
    %971 = vmatprep.subr.mxu0 0.0
    %972 = vmatpush2.msra.mxu0 0.0
    %973 = vmatprep.subr.mxu0 0.0
    %974 = vmatpush2.msra.mxu0 0.0
    %975 = vmatprep.subr.mxu0 0.0
    %976 = vmatpush2.msra.mxu0 0.0
    %977 = vmatprep.subr.mxu0 0.0
    %978 = vmatpush2.msra.mxu0 0.0
    %979 = vmatprep.subr.mxu0 0.0
    %980 = vmatpush2.msra.mxu0 0.0
    %981 = vmatprep.subr.mxu0 0.0
    %982 = vmatpush2.msra.mxu0 0.0
    %983 = vmatprep.mubr.f32.mxu0 0.0
    %984 = vmatmul.mubr.f32.gmra.mxu0 %v914
    %v985 = vpop.f32.mrf.mxu0
    %v986 = vadd.f32 0.0, %v985
    %v987 = vpop.f32.mrf.mxu0
    %988 = vmatprep.mubr.f32.mxu0 0.0
    %989 = vmatmul.mubr.f32.gmra.mxu0 %v917
    %v990 = vpop.f32.mrf.mxu0
    %v991 = vadd.f32 0.0, %v990
    %v992 = vpop.f32.mrf.mxu0
    %993 = vdwg.mxu0
    %996 = vrot.lane.b32.xlu0 %v586, 8
    %v997 = vpop.permute.xlu0 %996
    %998 = vrot.lane.b32.xlu0 %v591, 8
    %v999 = vpop.permute.xlu0 %998
    %1004 = vrot.lane.b32.xlu0 %v786, 16
    %v1005 = vpop.permute.xlu0 %1004
    %1006 = vrot.lane.b32.xlu0 %v791, 16
    %v1007 = vpop.permute.xlu0 %1006
    %1012 = vrot.lane.b32.xlu0 %v986, 24
    %v1013 = vpop.permute.xlu0 %1012
    %1014 = vrot.lane.b32.xlu0 %v991, 24
    %v1015 = vpop.permute.xlu0 %1014
    %v1018 = vsel %vm200, %v386, %v997
    %v1019 = vsel %vm200, %v391, %v999
    %v1020 = vsel %vm284, %v1018, %v1005
    %v1021 = vsel %vm284, %v1019, %v1007
    %vm1022 = vcmask 195584
    %v1023 = vsel %vm1022, %v1020, %v1013
    %v1024 = vsel %vm1022, %v1021, %v1015
    %v1025 = vlaneseq
    %v1026 = vshrl.u32 %v1025, 7
    %v1027 = vsub.s32 1, %v1026
    %v1028 = vrot.slane %v62, %v1027
    %v1030 = vsel %vm67, %v1023, 0
    %v1033 = vsel %vm67, %v1024, 0
    %1035 = vmatprep.subr.mxu0 0.0
    %1036 = vmatpush1.msra.mxu0 0.0
    %1037 = vmatprep.subr.mxu0 0.0
    %1038 = vmatpush1.msra.mxu0 0.0
    %1039 = vmatprep.subr.mxu0 0.0
    %1040 = vmatpush1.msra.mxu0 0.0
    %1041 = vmatprep.subr.mxu0 0.0
    %1042 = vmatpush1.msra.mxu0 0.0
    %1043 = vmatprep.subr.mxu0 0.0
    %1044 = vmatpush1.msra.mxu0 0.0
    %1045 = vmatprep.subr.mxu0 0.0
    %1046 = vmatpush1.msra.mxu0 0.0
    %1047 = vmatprep.subr.mxu0 0.0
    %1048 = vmatpush1.msra.mxu0 0.0
    %1049 = vmatprep.subr.mxu0 0.0
    %1050 = vmatpush1.msra.mxu0 0.0
    %1051 = vmatprep.subr.mxu0 0.0
    %1052 = vmatpush1.msra.mxu0 0.0
    %1053 = vmatprep.subr.mxu0 0.0
    %1054 = vmatpush1.msra.mxu0 0.0
    %1055 = vmatprep.subr.mxu0 0.0
    %1056 = vmatpush1.msra.mxu0 0.0
    %1057 = vmatprep.subr.mxu0 0.0
    %1058 = vmatpush1.msra.mxu0 0.0
    %1059 = vmatprep.subr.mxu0 0.0
    %1060 = vmatpush1.msra.mxu0 %v49
    %1061 = vmatprep.subr.mxu0 0.0
    %1062 = vmatpush1.msra.mxu0 %v48
    %1063 = vmatprep.subr.mxu0 0.0
    %1064 = vmatpush1.msra.mxu0 %v47
    %1065 = vmatprep.subr.mxu0 0.0
    %1066 = vmatpush1.msra.mxu0 %v46
    %1067 = vmatprep.subr.mxu0 0.0
    %1068 = vmatpush2.msra.mxu0 0.0
    %1069 = vmatprep.subr.mxu0 0.0
    %1070 = vmatpush2.msra.mxu0 0.0
    %1071 = vmatprep.subr.mxu0 0.0
    %1072 = vmatpush2.msra.mxu0 0.0
    %1073 = vmatprep.subr.mxu0 0.0
    %1074 = vmatpush2.msra.mxu0 0.0
    %1075 = vmatprep.subr.mxu0 0.0
    %1076 = vmatpush2.msra.mxu0 0.0
    %1077 = vmatprep.subr.mxu0 0.0
    %1078 = vmatpush2.msra.mxu0 0.0
    %1079 = vmatprep.subr.mxu0 0.0
    %1080 = vmatpush2.msra.mxu0 0.0
    %1081 = vmatprep.subr.mxu0 0.0
    %1082 = vmatpush2.msra.mxu0 0.0
    %1083 = vmatprep.subr.mxu0 0.0
    %1084 = vmatpush2.msra.mxu0 0.0
    %1085 = vmatprep.subr.mxu0 0.0
    %1086 = vmatpush2.msra.mxu0 0.0
    %1087 = vmatprep.subr.mxu0 0.0
    %1088 = vmatpush2.msra.mxu0 0.0
    %1089 = vmatprep.subr.mxu0 0.0
    %1090 = vmatpush2.msra.mxu0 0.0
    %1091 = vmatprep.subr.mxu0 0.0
    %1092 = vmatpush2.msra.mxu0 0.0
    %1093 = vmatprep.subr.mxu0 0.0
    %1094 = vmatpush2.msra.mxu0 0.0
    %1095 = vmatprep.subr.mxu0 0.0
    %1096 = vmatpush2.msra.mxu0 0.0
    %1097 = vmatprep.subr.mxu0 0.0
    %1098 = vmatpush2.msra.mxu0 0.0
    %1099 = vmatprep.mubr.f32.mxu0 0.0
    %1100 = vmatmul.mubr.f32.gmra.mxu0 %v1030
    %v1101 = vpop.f32.mrf.mxu0
    %v1102 = vadd.f32 %v1028, %v1101
    %v1103 = vpop.f32.mrf.mxu0
    %1104 = vmatprep.mubr.f32.mxu0 0.0
    %1105 = vmatmul.mubr.f32.gmra.mxu0 %v1033
    %v1106 = vpop.f32.mrf.mxu0
    %v1107 = vadd.f32 %v1028, %v1106
    %v1108 = vpop.f32.mrf.mxu0
    %1109 = vdwg.mxu0
    %v1110 = vadd.f32 %v40, %v1102
    %v1111 = vadd.f32 %v41, %v1107
    %v1112 = vsel %vm67, %v1110, 0.0
    %1113 = vadd.xlane.f32.xlu0 %v1112
    %v1114 = vpop.xlane.xlu0 %1113
    %v1115 = vsel %vm67, %v1111, 0.0
    %1116 = vadd.xlane.f32.xlu0 %v1115
    %v1117 = vpop.xlane.xlu0 %1116
    %v1118 = vrcp.pop 32.0
    %v1119 = vmul.f32 %v1114, %v1118
    %v1120 = vmul.f32 %v1117, %v1118
    %v1121 = vsub.f32 %v1110, %v1119
    %v1122 = vsub.f32 %v1111, %v1120
    %v1123 = vmul.f32 %v1121, %v1121
    %v1124 = vmul.f32 %v1122, %v1122
    %v1125 = vsel %vm67, %v1123, 0.0
    %1126 = vadd.xlane.f32.xlu0 %v1125
    %v1127 = vpop.xlane.xlu0 %1126
    %v1128 = vsel %vm67, %v1124, 0.0
    %1129 = vadd.xlane.f32.xlu0 %v1128
    %v1130 = vpop.xlane.xlu0 %1129
    %v1131 = vmul.f32 %v1127, %v1118
    %v1132 = vmul.f32 %v1130, %v1118
    %v1133 = vadd.f32 %v1131, 1e-05
    %v1134 = vadd.f32 %v1132, 1e-05
    %v1135 = vrsqrt.pop %v1133
    %v1136 = vrsqrt.pop %v1134
    %v1137 = vmul.f32 %v1121, %v1135
    %v1138 = vmul.f32 %v1122, %v1136
    %v1139 = vlaneseq
    %v1140 = vshrl.u32 %v1139, 7
    %v1141 = vsub.s32 4, %v1140
    %v1142 = vrot.slane %v62, %v1141
    %v1143 = vmul.f32 %v1137, %v1142
    %v1144 = vmul.f32 %v1138, %v1142
    %v1145 = vlaneseq
    %v1146 = vshrl.u32 %v1145, 7
    %v1147 = vsub.s32 5, %v1146
    %v1148 = vrot.slane %v62, %v1147
    %v1149 = vadd.f32 %v1143, %v1148
    %v1150 = vadd.f32 %v1144, %v1148
    %v1151 = vlaneseq
    %v1152 = vshrl.u32 %v1151, 7
    %v1153 = vsub.s32 2, %v1152
    %v1154 = vrot.slane %v62, %v1153
    %v1156 = vsel %vm67, %v1149, 0
    %v1159 = vsel %vm67, %v1150, 0
    %1161 = vmatprep.subr.mxu0 0.0
    %1162 = vmatpush1.msra.mxu0 0.0
    %1163 = vmatprep.subr.mxu0 0.0
    %1164 = vmatpush1.msra.mxu0 0.0
    %1165 = vmatprep.subr.mxu0 0.0
    %1166 = vmatpush1.msra.mxu0 0.0
    %1167 = vmatprep.subr.mxu0 0.0
    %1168 = vmatpush1.msra.mxu0 0.0
    %1169 = vmatprep.subr.mxu0 0.0
    %1170 = vmatpush1.msra.mxu0 0.0
    %1171 = vmatprep.subr.mxu0 0.0
    %1172 = vmatpush1.msra.mxu0 0.0
    %1173 = vmatprep.subr.mxu0 0.0
    %1174 = vmatpush1.msra.mxu0 0.0
    %1175 = vmatprep.subr.mxu0 0.0
    %1176 = vmatpush1.msra.mxu0 0.0
    %1177 = vmatprep.subr.mxu0 0.0
    %1178 = vmatpush1.msra.mxu0 0.0
    %1179 = vmatprep.subr.mxu0 0.0
    %1180 = vmatpush1.msra.mxu0 0.0
    %1181 = vmatprep.subr.mxu0 0.0
    %1182 = vmatpush1.msra.mxu0 0.0
    %1183 = vmatprep.subr.mxu0 0.0
    %1184 = vmatpush1.msra.mxu0 0.0
    %1185 = vmatprep.subr.mxu0 0.0
    %1186 = vmatpush1.msra.mxu0 %v53
    %1187 = vmatprep.subr.mxu0 0.0
    %1188 = vmatpush1.msra.mxu0 %v52
    %1189 = vmatprep.subr.mxu0 0.0
    %1190 = vmatpush1.msra.mxu0 %v51
    %1191 = vmatprep.subr.mxu0 0.0
    %1192 = vmatpush1.msra.mxu0 %v50
    %1193 = vmatprep.subr.mxu0 0.0
    %1194 = vmatpush2.msra.mxu0 0.0
    %1195 = vmatprep.subr.mxu0 0.0
    %1196 = vmatpush2.msra.mxu0 0.0
    %1197 = vmatprep.subr.mxu0 0.0
    %1198 = vmatpush2.msra.mxu0 0.0
    %1199 = vmatprep.subr.mxu0 0.0
    %1200 = vmatpush2.msra.mxu0 0.0
    %1201 = vmatprep.subr.mxu0 0.0
    %1202 = vmatpush2.msra.mxu0 0.0
    %1203 = vmatprep.subr.mxu0 0.0
    %1204 = vmatpush2.msra.mxu0 0.0
    %1205 = vmatprep.subr.mxu0 0.0
    %1206 = vmatpush2.msra.mxu0 0.0
    %1207 = vmatprep.subr.mxu0 0.0
    %1208 = vmatpush2.msra.mxu0 0.0
    %1209 = vmatprep.subr.mxu0 0.0
    %1210 = vmatpush2.msra.mxu0 0.0
    %1211 = vmatprep.subr.mxu0 0.0
    %1212 = vmatpush2.msra.mxu0 0.0
    %1213 = vmatprep.subr.mxu0 0.0
    %1214 = vmatpush2.msra.mxu0 0.0
    %1215 = vmatprep.subr.mxu0 0.0
    %1216 = vmatpush2.msra.mxu0 0.0
    %1217 = vmatprep.subr.mxu0 0.0
    %1218 = vmatpush2.msra.mxu0 0.0
    %1219 = vmatprep.subr.mxu0 0.0
    %1220 = vmatpush2.msra.mxu0 0.0
    %1221 = vmatprep.subr.mxu0 0.0
    %1222 = vmatpush2.msra.mxu0 0.0
    %1223 = vmatprep.subr.mxu0 0.0
    %1224 = vmatpush2.msra.mxu0 0.0
    %1225 = vmatprep.mubr.f32.mxu0 0.0
    %1226 = vmatmul.mubr.f32.gmra.mxu0 %v1156
    %v1227 = vpop.f32.mrf.mxu0
    %v1228 = vadd.f32 %v1154, %v1227
    %v1229 = vpop.f32.mrf.mxu0
    %1230 = vmatprep.mubr.f32.mxu0 0.0
    %1231 = vmatmul.mubr.f32.gmra.mxu0 %v1159
    %v1232 = vpop.f32.mrf.mxu0
    %v1233 = vadd.f32 %v1154, %v1232
    %v1234 = vpop.f32.mrf.mxu0
    %1235 = vdwg.mxu0
    %v1236 = vlaneseq
    %v1237 = vshrl.u32 %v1236, 7
    %v1238 = vsub.s32 3, %v1237
    %v1239 = vrot.slane %v62, %v1238
    %vm1240 = vcmask 523264
    %v1242 = vsel %vm1240, %v1228, 0
    %v1245 = vsel %vm1240, %v1233, 0
    %1247 = vmatprep.subr.mxu0 0.0
    %1248 = vmatpush1.msra.mxu0 0.0
    %1249 = vmatprep.subr.mxu0 0.0
    %1250 = vmatpush1.msra.mxu0 0.0
    %1251 = vmatprep.subr.mxu0 0.0
    %1252 = vmatpush1.msra.mxu0 0.0
    %1253 = vmatprep.subr.mxu0 0.0
    %1254 = vmatpush1.msra.mxu0 0.0
    %1255 = vmatprep.subr.mxu0 0.0
    %1256 = vmatpush1.msra.mxu0 0.0
    %1257 = vmatprep.subr.mxu0 0.0
    %1258 = vmatpush1.msra.mxu0 0.0
    %1259 = vmatprep.subr.mxu0 0.0
    %1260 = vmatpush1.msra.mxu0 0.0
    %1261 = vmatprep.subr.mxu0 0.0
    %1262 = vmatpush1.msra.mxu0 0.0
    %1263 = vmatprep.subr.mxu0 0.0
    %1264 = vmatpush1.msra.mxu0 %v61
    %1265 = vmatprep.subr.mxu0 0.0
    %1266 = vmatpush1.msra.mxu0 %v60
    %1267 = vmatprep.subr.mxu0 0.0
    %1268 = vmatpush1.msra.mxu0 %v59
    %1269 = vmatprep.subr.mxu0 0.0
    %1270 = vmatpush1.msra.mxu0 %v58
    %1271 = vmatprep.subr.mxu0 0.0
    %1272 = vmatpush1.msra.mxu0 %v57
    %1273 = vmatprep.subr.mxu0 0.0
    %1274 = vmatpush1.msra.mxu0 %v56
    %1275 = vmatprep.subr.mxu0 0.0
    %1276 = vmatpush1.msra.mxu0 %v55
    %1277 = vmatprep.subr.mxu0 0.0
    %1278 = vmatpush1.msra.mxu0 %v54
    %1279 = vmatprep.subr.mxu0 0.0
    %1280 = vmatpush2.msra.mxu0 0.0
    %1281 = vmatprep.subr.mxu0 0.0
    %1282 = vmatpush2.msra.mxu0 0.0
    %1283 = vmatprep.subr.mxu0 0.0
    %1284 = vmatpush2.msra.mxu0 0.0
    %1285 = vmatprep.subr.mxu0 0.0
    %1286 = vmatpush2.msra.mxu0 0.0
    %1287 = vmatprep.subr.mxu0 0.0
    %1288 = vmatpush2.msra.mxu0 0.0
    %1289 = vmatprep.subr.mxu0 0.0
    %1290 = vmatpush2.msra.mxu0 0.0
    %1291 = vmatprep.subr.mxu0 0.0
    %1292 = vmatpush2.msra.mxu0 0.0
    %1293 = vmatprep.subr.mxu0 0.0
    %1294 = vmatpush2.msra.mxu0 0.0
    %1295 = vmatprep.subr.mxu0 0.0
    %1296 = vmatpush2.msra.mxu0 0.0
    %1297 = vmatprep.subr.mxu0 0.0
    %1298 = vmatpush2.msra.mxu0 0.0
    %1299 = vmatprep.subr.mxu0 0.0
    %1300 = vmatpush2.msra.mxu0 0.0
    %1301 = vmatprep.subr.mxu0 0.0
    %1302 = vmatpush2.msra.mxu0 0.0
    %1303 = vmatprep.subr.mxu0 0.0
    %1304 = vmatpush2.msra.mxu0 0.0
    %1305 = vmatprep.subr.mxu0 0.0
    %1306 = vmatpush2.msra.mxu0 0.0
    %1307 = vmatprep.subr.mxu0 0.0
    %1308 = vmatpush2.msra.mxu0 0.0
    %1309 = vmatprep.subr.mxu0 0.0
    %1310 = vmatpush2.msra.mxu0 0.0
    %1311 = vmatprep.mubr.f32.mxu0 0.0
    %1312 = vmatmul.mubr.f32.gmra.mxu0 %v1242
    %v1313 = vpop.f32.mrf.mxu0
    %v1314 = vadd.f32 %v1239, %v1313
    %v1315 = vpop.f32.mrf.mxu0
    %1316 = vmatprep.mubr.f32.mxu0 0.0
    %1317 = vmatmul.mubr.f32.gmra.mxu0 %v1245
    %v1318 = vpop.f32.mrf.mxu0
    %v1319 = vadd.f32 %v1239, %v1318
    %v1320 = vpop.f32.mrf.mxu0
    %1321 = vdwg.mxu0
    %v1322 = vadd.f32 %v1149, %v1314
    %v1323 = vadd.f32 %v1150, %v1319
    %v1324 = vsel %vm67, %v1322, 0.0
    %1325 = vadd.xlane.f32.xlu0 %v1324
    %v1326 = vpop.xlane.xlu0 %1325
    %v1327 = vsel %vm67, %v1323, 0.0
    %1328 = vadd.xlane.f32.xlu0 %v1327
    %v1329 = vpop.xlane.xlu0 %1328
    %v1330 = vmul.f32 %v1326, %v1118
    %v1331 = vmul.f32 %v1329, %v1118
    %v1332 = vsub.f32 %v1322, %v1330
    %v1333 = vsub.f32 %v1323, %v1331
    %v1334 = vmul.f32 %v1332, %v1332
    %v1335 = vmul.f32 %v1333, %v1333
    %v1336 = vsel %vm67, %v1334, 0.0
    %1337 = vadd.xlane.f32.xlu0 %v1336
    %v1338 = vpop.xlane.xlu0 %1337
    %v1339 = vsel %vm67, %v1335, 0.0
    %1340 = vadd.xlane.f32.xlu0 %v1339
    %v1341 = vpop.xlane.xlu0 %1340
    %v1342 = vmul.f32 %v1338, %v1118
    %v1343 = vmul.f32 %v1341, %v1118
    %v1344 = vadd.f32 %v1342, 1e-05
    %v1345 = vadd.f32 %v1343, 1e-05
    %v1346 = vrsqrt.pop %v1344
    %v1347 = vrsqrt.pop %v1345
    %v1348 = vmul.f32 %v1332, %v1346
    %v1349 = vmul.f32 %v1333, %v1347
    %v1350 = vlaneseq
    %v1351 = vshrl.u32 %v1350, 7
    %v1352 = vsub.s32 6, %v1351
    %v1353 = vrot.slane %v62, %v1352
    %v1354 = vmul.f32 %v1348, %v1353
    %v1355 = vmul.f32 %v1349, %v1353
    %v1356 = vlaneseq
    %v1357 = vshrl.u32 %v1356, 7
    %v1358 = vsub.s32 7, %v1357
    %v1359 = vrot.slane %v62, %v1358
    %v1360 = vadd.f32 %v1354, %v1359
    %v1361 = vadd.f32 %v1355, %v1359
    %1362 = vst.msk [vmem:[#allocation7] sm:$0xff] %vm67, %v1360
    %1363 = vst.msk [vmem:[#allocation7 + $0x8] sm:$0xff] %vm67, %v1361
    // Predicated region
    $region18: #{ekd_transformer_layer.1} parent=1 // pred_check
      _
    $region19: #{ekd_transformer_layer.1} parent=1 // pred_check_branch
      %1365 = sbr.rel (0) target = $region21
    $region20: #{ekd_transformer_layer.1} parent=1 // pred_region
      %s1367 = ssub.s32 256, 256
      %1368 = vsyncadd [#allocation4], %s1367
      %s1369 = sshll.u32 [#allocation7], 4
      %s1370 = int_to_ptr.vmem [resolvable:$true] %s1369
      %1375 = dma.vmem_to_hbm [thread:$0]  %s1370, 256, %s2, [#allocation4], 128, 128, 8
    $region21: #{ekd_transformer_layer.1} parent=1 // pred_fallthru
      _
    // Predicated region
    $region22: #{ekd_transformer_layer.1} parent=1 // pred_check
      _
    $region23: #{ekd_transformer_layer.1} parent=1 // pred_check_branch
      %1377 = sbr.rel (0) target = $region25
    $region24: #{ekd_transformer_layer.1} parent=1 // pred_region
      %1378 = dma.done [#allocation4], 256
    $region25: #{ekd_transformer_layer.1} parent=1 // pred_fallthru
      _
    %1379 = vsyncpa [#allocation3], 1
    %1380 = vsyncpa [#allocation6], 1
    %1381 = vsyncpa [#allocation4], 1

</llo_original>
